<compile_context>
chip_gen: v7x
topology: tpu7x:2x2x1
jax: 0.10.0
libtpu: 0.0.40
codegen_flags: <defaults>
</compile_context>

<pallas_src>
import functools

import jax
import jax.numpy as jnp
from jax.experimental import pallas as pl
from jax.experimental.pallas import tpu as pltpu

EPS = 1e-5


# ---------------------------------------------------------------------------
# Fused band kernel: |gradients| + per-(patch, channel) cosine statistics.
# ---------------------------------------------------------------------------
def _band_kernel(x_ref, y_ref, hx_ref, hy_ref, stats_ref, *,
                 C, ph, pw, n_h, rows_per_band):
    """Process one (batch, band) tile.

    x_ref, y_ref   : (1, C, rows_per_band*ph, W) band of the two images.
    hx_ref, hy_ref : (1, 1, C, 1, W) the image row just below the band
                     (all zeros for the bottom band == conv2d(padding=1)).
    stats_ref      : (1, rows_per_band, 6, C, n_h) with the 6 stats
                     [<sa,sb>_w, <sa,sb>_h, <sa,sa>_w, <sa,sa>_h,
                      <sb,sb>_w, <sb,sb>_h]
                     where sa / sb are the min-shifted |gradients| of x / y.
                     (A channel permutation of PyTorch's interleaved 2C layout;
                     all downstream reductions are permutation invariant.)
    """
    npix = float(ph * pw)
    zero_col = jnp.zeros((C, ph, 1), jnp.float32)

    hx = hx_ref[0, 0].astype(jnp.float32)          # (C, 1, W)
    hy = hy_ref[0, 0].astype(jnp.float32)

    def abs_grads(t, nrow):
        # t: (C, ph, W) one patch row of pixels; nrow: (C, 1, W) row below it.
        #   gw[h, w] = |t[h, w] - t[h, w+1]|   (zero neighbour past last column)
        #   gh[h, w] = |t[h, w] - t[h+1, w]|   (nrow supplies the row below)
        right = jnp.concatenate([t[:, :, 1:], zero_col], axis=2)
        below = jnp.concatenate([t[:, 1:, :], nrow], axis=1)
        return jnp.abs(t - right), jnp.abs(t - below)

    def patch_row_stats(a, b):
        # a, b: (C, ph, W) |gradients| of x / y for one direction.
        # Per-pixel work is fully vectorized over the whole patch row; the
        # per-patch min is folded in algebraically so no broadcast-subtract
        # over pixels is needed:
        #   sum((a-ma)(b-mb)) = Sab - mb*Sa - ma*Sb + N*ma*mb
        sa_r = jnp.sum(a, axis=1)                  # (C, W)
        sb_r = jnp.sum(b, axis=1)
        sab_r = jnp.sum(a * b, axis=1)
        saa_r = jnp.sum(a * a, axis=1)
        sbb_r = jnp.sum(b * b, axis=1)
        ma_r = jnp.min(a, axis=1)                  # (C, W)
        mb_r = jnp.min(b, axis=1)

        def seg_sum(r, j):
            return jnp.sum(r[:, j * pw:(j + 1) * pw], axis=-1, keepdims=True)

        def seg_min(r, j):
            return jnp.min(r[:, j * pw:(j + 1) * pw], axis=-1, keepdims=True)

        w12_cols, w1_cols, w2_cols = [], [], []
        for j in range(n_h):                       # tiny tail: n_h column segments
            sa, sb = seg_sum(sa_r, j), seg_sum(sb_r, j)
            sab, saa, sbb = seg_sum(sab_r, j), seg_sum(saa_r, j), seg_sum(sbb_r, j)
            ma, mb = seg_min(ma_r, j), seg_min(mb_r, j)
            w12_cols.append(sab - mb * sa - ma * sb + npix * ma * mb)
            w1_cols.append(saa - 2.0 * ma * sa + npix * ma * ma)
            w2_cols.append(sbb - 2.0 * mb * sb + npix * mb * mb)
        w12 = jnp.concatenate(w12_cols, axis=-1)   # (C, n_h)
        w1 = jnp.concatenate(w1_cols, axis=-1)
        w2 = jnp.concatenate(w2_cols, axis=-1)
        return w12, w1, w2

    row_stats = []
    for k in range(rows_per_band):
        r0 = k * ph
        tx = x_ref[0, :, r0:r0 + ph, :].astype(jnp.float32)        # (C, ph, W)
        ty = y_ref[0, :, r0:r0 + ph, :].astype(jnp.float32)
        if k + 1 < rows_per_band:
            nx = x_ref[0, :, r0 + ph:r0 + ph + 1, :].astype(jnp.float32)
            ny = y_ref[0, :, r0 + ph:r0 + ph + 1, :].astype(jnp.float32)
        else:
            nx, ny = hx, hy                                        # band-bottom halo

        gxw, gxh = abs_grads(tx, nx)               # |gradients| of x (w / h dirs)
        gyw, gyh = abs_grads(ty, ny)               # |gradients| of y

        w12w, w1w, w2w = patch_row_stats(gxw, gyw)
        w12h, w1h, w2h = patch_row_stats(gxh, gyh)
        row_stats.append(jnp.stack([w12w, w12h, w1w, w1h, w2w, w2h], axis=0))

    # Single block store per grid step (no per-patch masked C-lane writes).
    stats_ref[0] = jnp.stack(row_stats, axis=0)    # (rows_per_band, 6, C, n_h)


# ---------------------------------------------------------------------------
# Band-size heuristic (keeps 2 tensors x 2 pipeline buffers well under the
# 16 MiB v5e / 32 MiB v6e-v7x default scoped-VMEM limits).
# ---------------------------------------------------------------------------
def _pick_rows_per_band(n_v, ph, W, C, itemsize, max_band_bytes):
    valid = [r for r in range(1, n_v + 1)
             if n_v % r == 0 and ((r * ph) % 8 == 0 or r == n_v)]
    fitting = [r for r in valid if C * r * ph * W * itemsize <= max_band_bytes]
    return max(fitting) if fitting else min(valid)


# ---------------------------------------------------------------------------
# Scalar combine (tiny, plain JAX).
# ---------------------------------------------------------------------------
def _cosine_dist_angle_from_sums(w12, w1, w2, eps=EPS):
    # Matches F.cosine_similarity: sim = <a,b> / sqrt(clamp_min(|a|^2*|b|^2, eps^2))
    sim = w12 / jnp.sqrt(jnp.maximum(w1 * w2, eps * eps))
    distance = 1.0 - jnp.mean(sim)
    angle = jnp.mean(jnp.arccos(jnp.clip(sim, -1.0 + eps, 1.0 - eps)))
    return distance + angle


def grad_loss(x, y, n_patch_horizontal, n_patch_vertical, *,
              max_band_bytes=512 * 1024):
    B, C, H, W = x.shape
    n_h, n_v = int(n_patch_horizontal), int(n_patch_vertical)
    assert H % n_v == 0 and W % n_h == 0, "patch grid must divide the image"
    ph, pw = H // n_v, W // n_h

    itemsize = jnp.dtype(x.dtype).itemsize
    rv = _pick_rows_per_band(n_v, ph, W, C, itemsize, max_band_bytes)
    nb = n_v // rv                 # bands per image (grid steps)
    bh = rv * ph                   # band height in pixels

    # One image row per band: the row just below the band (zeros for the last
    # band == the conv2d(padding=1) bottom boundary of the [1,-1]^T stencil).
    # Tiny (1/bh of the image) - replaces the previous full-image jnp.pad pass.
    def halo_rows(t):
        h = t[:, :, bh::bh, :]                                     # (B, C, nb-1, W)
        h = jnp.concatenate([h, jnp.zeros((B, C, 1, W), t.dtype)], axis=2)
        return jnp.transpose(h, (0, 2, 1, 3)).reshape(B, nb, C, 1, W)

    hx, hy = halo_rows(x), halo_rows(y)

    kernel = functools.partial(_band_kernel, C=C, ph=ph, pw=pw, n_h=n_h,
                               rows_per_band=rv)

    stats = pl.pallas_call(
        kernel,
        out_shape=jax.ShapeDtypeStruct((B, n_v, 6, C, n_h), jnp.float32),
        grid=(B, nb),
        in_specs=[
            pl.BlockSpec((1, C, bh, W), lambda b, g: (b, 0, g, 0)),
            pl.BlockSpec((1, C, bh, W), lambda b, g: (b, 0, g, 0)),
            pl.BlockSpec((1, 1, C, 1, W), lambda b, g: (b, g, 0, 0, 0)),
            pl.BlockSpec((1, 1, C, 1, W), lambda b, g: (b, g, 0, 0, 0)),
        ],
        out_specs=pl.BlockSpec((1, rv, 6, C, n_h),
                               lambda b, g: (b, g, 0, 0, 0)),
        compiler_params=pltpu.CompilerParams(
            dimension_semantics=("parallel", "parallel")),
    )(x, y, hx, hy)

    w12 = stats[:, :, 0:2]         # (B, n_v, 2, C, n_h): per (patch, 2C channel)
    w1 = stats[:, :, 2:4]
    w2 = stats[:, :, 4:6]

    # cosine over flatten(2): one sim per (patch, 2C channel)
    loss_ch = _cosine_dist_angle_from_sums(w12, w1, w2)
    # cosine over flatten(1): one sim per patch (vectors of length 2C*ph*pw)
    loss_tile = _cosine_dist_angle_from_sums(
        w12.sum(axis=(2, 3)), w1.sum(axis=(2, 3)), w2.sum(axis=(2, 3)))
    return loss_ch + loss_tile


# ---------------------------------------------------------------------------
# Pure-JAX reference (self-check against the PyTorch semantics).
# ---------------------------------------------------------------------------
def _to_tiles(g, n1, n2):
    """'b c (n1 h) (n2 w) -> (b n1 n2) c (h w)'."""
    B, C2, H, W = g.shape
    ph, pw = H // n1, W // n2
    g = g.reshape(B, C2, n1, ph, n2, pw)
    g = g.transpose(0, 2, 4, 1, 3, 5)
    return g.reshape(B * n1 * n2, C2, ph * pw)


def _ref_grad_loss(x, y, n_h, n_v, eps=EPS):
    def abs_grads(t):
        B, C, H, W = t.shape
        right = jnp.concatenate([t[..., 1:], jnp.zeros((B, C, H, 1), t.dtype)], axis=-1)
        down = jnp.concatenate([t[..., 1:, :], jnp.zeros((B, C, 1, W), t.dtype)], axis=-2)
        return jnp.concatenate([jnp.abs(t - right), jnp.abs(t - down)], axis=1)

    tx = _to_tiles(abs_grads(x), n_v, n_h)
    ty = _to_tiles(abs_grads(y), n_v, n_h)
    sx = tx - jnp.abs(tx.min(axis=-1, keepdims=True))
    sy = ty - jnp.abs(ty.min(axis=-1, keepdims=True))

    def cda(a, b):
        w12 = jnp.sum(a * b, -1)
        w1 = jnp.sum(a * a, -1)
        w2 = jnp.sum(b * b, -1)
        sim = w12 / jnp.sqrt(jnp.maximum(w1 * w2, eps * eps))
        return (1.0 - sim.mean()) + jnp.arccos(jnp.clip(sim, -1.0 + eps, 1.0 - eps)).mean()

    P, C2, L = sx.shape
    return cda(sx, sy) + cda(sx.reshape(P, C2 * L), sy.reshape(P, C2 * L))


if __name__ == "__main__":
    B, C, H, W = 2, 4, 16, 16
    n_patch_horizontal, n_patch_vertical = 2, 2
    ph = H // n_patch_vertical

    key = jax.random.PRNGKey(0)
    kx, ky = jax.random.split(key)
    x = jax.random.normal(kx, (B, C, H, W), dtype=jnp.float32)
    y = jax.random.normal(ky, (B, C, H, W), dtype=jnp.float32)

    ref = _ref_grad_loss(x, y, n_patch_horizontal, n_patch_vertical)

    # Default band selection (all patch rows fit in one band at this size).
    loss_fn = jax.jit(
        lambda a, b: grad_loss(a, b, n_patch_horizontal, n_patch_vertical))
    loss = loss_fn(x, y)
    jax.block_until_ready(loss)
    assert jnp.isfinite(loss), loss
    assert jnp.allclose(loss, ref, rtol=1e-4, atol=1e-5), (float(loss), float(ref))

    # Force one-patch-row bands to exercise the multi-band / real-halo path.
    loss_banded_fn = jax.jit(
        lambda a, b: grad_loss(a, b, n_patch_horizontal, n_patch_vertical,
                               max_band_bytes=C * ph * W * 4))
    loss_banded = loss_banded_fn(x, y)
    jax.block_until_ready(loss_banded)
    assert jnp.allclose(loss_banded, ref, rtol=1e-4, atol=1e-5), (
        float(loss_banded), float(ref))

    print("KERNEL_OK")
</pallas_src>

<mosaic_0001>
module attributes {stable_mosaic.version = 11 : i64} {
  func.func @_band_kernel(%arg0: i32, %arg1: i32, %arg2: memref<1x4x16x16xf32, #tpu.memory_space<vmem>>, %arg3: memref<1x4x16x16xf32, #tpu.memory_space<vmem>>, %arg4: memref<1x1x4x1x16xf32, #tpu.memory_space<vmem>>, %arg5: memref<1x1x4x1x16xf32, #tpu.memory_space<vmem>>, %arg6: memref<1x2x6x4x2xf32, #tpu.memory_space<vmem>>) attributes {dimension_semantics = [#tpu.dimension_semantics<parallel>, #tpu.dimension_semantics<parallel>], iteration_bounds = array<i64: 2, 1>, scalar_prefetch = 0 : i64, scratch_operands = 0 : i64, tpu.core_type = #tpu.core_type<tc>, window_params = [{transform_indices = @transform_0, window_bounds = array<i64: 1, 4, 16, 16>}, {transform_indices = @transform_1, window_bounds = array<i64: 1, 4, 16, 16>}, {transform_indices = @transform_2, window_bounds = array<i64: 1, 1, 4, 1, 16>}, {transform_indices = @transform_3, window_bounds = array<i64: 1, 1, 4, 1, 16>}, {transform_indices = @transform_4, window_bounds = array<i64: 1, 2, 6, 4, 2>}]} {
    %cst = arith.constant 0.000000e+00 : f32
    %0 = vector.broadcast %cst : f32 to vector<4x8x1xf32>
    %c0 = arith.constant 0 : index
    %c0_0 = arith.constant 0 : index
    %c0_1 = arith.constant 0 : index
    %c0_2 = arith.constant 0 : index
    %c0_3 = arith.constant 0 : index
    %1 = vector.load %arg4[%c0, %c0_0, %c0_1, %c0_2, %c0_3] : memref<1x1x4x1x16xf32, #tpu.memory_space<vmem>>, vector<1x1x4x1x16xf32>
    %2 = vector.shape_cast %1 : vector<1x1x4x1x16xf32> to vector<4x1x16xf32>
    %c0_4 = arith.constant 0 : index
    %c0_5 = arith.constant 0 : index
    %c0_6 = arith.constant 0 : index
    %c0_7 = arith.constant 0 : index
    %c0_8 = arith.constant 0 : index
    %3 = vector.load %arg5[%c0_4, %c0_5, %c0_6, %c0_7, %c0_8] : memref<1x1x4x1x16xf32, #tpu.memory_space<vmem>>, vector<1x1x4x1x16xf32>
    %4 = vector.shape_cast %3 : vector<1x1x4x1x16xf32> to vector<4x1x16xf32>
    %c0_9 = arith.constant 0 : index
    %c0_10 = arith.constant 0 : index
    %c0_11 = arith.constant 0 : index
    %c0_12 = arith.constant 0 : index
    %5 = vector.load %arg2[%c0_9, %c0_10, %c0_11, %c0_12] : memref<1x4x16x16xf32, #tpu.memory_space<vmem>>, vector<1x4x8x16xf32>
    %6 = vector.shape_cast %5 : vector<1x4x8x16xf32> to vector<4x8x16xf32>
    %c0_13 = arith.constant 0 : index
    %c0_14 = arith.constant 0 : index
    %c0_15 = arith.constant 0 : index
    %c0_16 = arith.constant 0 : index
    %7 = vector.load %arg3[%c0_13, %c0_14, %c0_15, %c0_16] : memref<1x4x16x16xf32, #tpu.memory_space<vmem>>, vector<1x4x8x16xf32>
    %8 = vector.shape_cast %7 : vector<1x4x8x16xf32> to vector<4x8x16xf32>
    %c0_17 = arith.constant 0 : index
    %c0_18 = arith.constant 0 : index
    %c8 = arith.constant 8 : index
    %c0_19 = arith.constant 0 : index
    %9 = vector.load %arg2[%c0_17, %c0_18, %c8, %c0_19] : memref<1x4x16x16xf32, #tpu.memory_space<vmem>>, vector<1x4x1x16xf32>
    %10 = vector.shape_cast %9 : vector<1x4x1x16xf32> to vector<4x1x16xf32>
    %c0_20 = arith.constant 0 : index
    %c0_21 = arith.constant 0 : index
    %c8_22 = arith.constant 8 : index
    %c0_23 = arith.constant 0 : index
    %11 = vector.load %arg3[%c0_20, %c0_21, %c8_22, %c0_23] : memref<1x4x16x16xf32, #tpu.memory_space<vmem>>, vector<1x4x1x16xf32>
    %12 = vector.shape_cast %11 : vector<1x4x1x16xf32> to vector<4x1x16xf32>
    %13 = vector.extract_strided_slice %6 {offsets = [0, 0, 1], sizes = [4, 8, 15], strides = [1, 1, 1]} : vector<4x8x16xf32> to vector<4x8x15xf32>
    %14 = tpu.concatenate %13, %0 in 2 : vector<4x8x15xf32>, vector<4x8x1xf32> -> vector<4x8x16xf32>
    %15 = vector.extract_strided_slice %6 {offsets = [0, 1, 0], sizes = [4, 7, 16], strides = [1, 1, 1]} : vector<4x8x16xf32> to vector<4x7x16xf32>
    %16 = tpu.concatenate %15, %10 in 1 : vector<4x7x16xf32>, vector<4x1x16xf32> -> vector<4x8x16xf32>
    %17 = arith.subf %6, %14 : vector<4x8x16xf32>
    %18 = math.absf %17 : vector<4x8x16xf32>
    %19 = arith.subf %6, %16 : vector<4x8x16xf32>
    %20 = math.absf %19 : vector<4x8x16xf32>
    %21 = vector.extract_strided_slice %8 {offsets = [0, 0, 1], sizes = [4, 8, 15], strides = [1, 1, 1]} : vector<4x8x16xf32> to vector<4x8x15xf32>
    %22 = tpu.concatenate %21, %0 in 2 : vector<4x8x15xf32>, vector<4x8x1xf32> -> vector<4x8x16xf32>
    %23 = vector.extract_strided_slice %8 {offsets = [0, 1, 0], sizes = [4, 7, 16], strides = [1, 1, 1]} : vector<4x8x16xf32> to vector<4x7x16xf32>
    %24 = tpu.concatenate %23, %12 in 1 : vector<4x7x16xf32>, vector<4x1x16xf32> -> vector<4x8x16xf32>
    %25 = arith.subf %8, %22 : vector<4x8x16xf32>
    %26 = math.absf %25 : vector<4x8x16xf32>
    %27 = arith.subf %8, %24 : vector<4x8x16xf32>
    %28 = math.absf %27 : vector<4x8x16xf32>
    %cst_24 = arith.constant dense<0.000000e+00> : vector<4x16xf32>
    %29 = vector.multi_reduction <add>, %18, %cst_24 [1] : vector<4x8x16xf32> to vector<4x16xf32>
    %cst_25 = arith.constant dense<0.000000e+00> : vector<4x16xf32>
    %30 = vector.multi_reduction <add>, %26, %cst_25 [1] : vector<4x8x16xf32> to vector<4x16xf32>
    %31 = arith.mulf %18, %26 : vector<4x8x16xf32>
    %cst_26 = arith.constant dense<0.000000e+00> : vector<4x16xf32>
    %32 = vector.multi_reduction <add>, %31, %cst_26 [1] : vector<4x8x16xf32> to vector<4x16xf32>
    %33 = arith.mulf %18, %18 : vector<4x8x16xf32>
    %cst_27 = arith.constant dense<0.000000e+00> : vector<4x16xf32>
    %34 = vector.multi_reduction <add>, %33, %cst_27 [1] : vector<4x8x16xf32> to vector<4x16xf32>
    %35 = arith.mulf %26, %26 : vector<4x8x16xf32>
    %cst_28 = arith.constant dense<0.000000e+00> : vector<4x16xf32>
    %36 = vector.multi_reduction <add>, %35, %cst_28 [1] : vector<4x8x16xf32> to vector<4x16xf32>
    %cst_29 = arith.constant dense<0x7F800000> : vector<4x16xf32>
    %37 = vector.multi_reduction <minimumf>, %18, %cst_29 [1] : vector<4x8x16xf32> to vector<4x16xf32>
    %cst_30 = arith.constant dense<0x7F800000> : vector<4x16xf32>
    %38 = vector.multi_reduction <minimumf>, %26, %cst_30 [1] : vector<4x8x16xf32> to vector<4x16xf32>
    %39 = vector.extract_strided_slice %29 {offsets = [0, 0], sizes = [4, 8], strides = [1, 1]} : vector<4x16xf32> to vector<4x8xf32>
    %cst_31 = arith.constant dense<0.000000e+00> : vector<4xf32>
    %40 = vector.multi_reduction <add>, %39, %cst_31 [1] : vector<4x8xf32> to vector<4xf32>
    %41 = vector.shape_cast %40 : vector<4xf32> to vector<4x1xf32>
    %42 = vector.extract_strided_slice %30 {offsets = [0, 0], sizes = [4, 8], strides = [1, 1]} : vector<4x16xf32> to vector<4x8xf32>
    %cst_32 = arith.constant dense<0.000000e+00> : vector<4xf32>
    %43 = vector.multi_reduction <add>, %42, %cst_32 [1] : vector<4x8xf32> to vector<4xf32>
    %44 = vector.shape_cast %43 : vector<4xf32> to vector<4x1xf32>
    %45 = vector.extract_strided_slice %32 {offsets = [0, 0], sizes = [4, 8], strides = [1, 1]} : vector<4x16xf32> to vector<4x8xf32>
    %cst_33 = arith.constant dense<0.000000e+00> : vector<4xf32>
    %46 = vector.multi_reduction <add>, %45, %cst_33 [1] : vector<4x8xf32> to vector<4xf32>
    %47 = vector.shape_cast %46 : vector<4xf32> to vector<4x1xf32>
    %48 = vector.extract_strided_slice %34 {offsets = [0, 0], sizes = [4, 8], strides = [1, 1]} : vector<4x16xf32> to vector<4x8xf32>
    %cst_34 = arith.constant dense<0.000000e+00> : vector<4xf32>
    %49 = vector.multi_reduction <add>, %48, %cst_34 [1] : vector<4x8xf32> to vector<4xf32>
    %50 = vector.shape_cast %49 : vector<4xf32> to vector<4x1xf32>
    %51 = vector.extract_strided_slice %36 {offsets = [0, 0], sizes = [4, 8], strides = [1, 1]} : vector<4x16xf32> to vector<4x8xf32>
    %cst_35 = arith.constant dense<0.000000e+00> : vector<4xf32>
    %52 = vector.multi_reduction <add>, %51, %cst_35 [1] : vector<4x8xf32> to vector<4xf32>
    %53 = vector.shape_cast %52 : vector<4xf32> to vector<4x1xf32>
    %54 = vector.extract_strided_slice %37 {offsets = [0, 0], sizes = [4, 8], strides = [1, 1]} : vector<4x16xf32> to vector<4x8xf32>
    %cst_36 = arith.constant dense<0x7F800000> : vector<4xf32>
    %55 = vector.multi_reduction <minimumf>, %54, %cst_36 [1] : vector<4x8xf32> to vector<4xf32>
    %56 = vector.shape_cast %55 : vector<4xf32> to vector<4x1xf32>
    %57 = vector.extract_strided_slice %38 {offsets = [0, 0], sizes = [4, 8], strides = [1, 1]} : vector<4x16xf32> to vector<4x8xf32>
    %cst_37 = arith.constant dense<0x7F800000> : vector<4xf32>
    %58 = vector.multi_reduction <minimumf>, %57, %cst_37 [1] : vector<4x8xf32> to vector<4xf32>
    %59 = vector.shape_cast %58 : vector<4xf32> to vector<4x1xf32>
    %60 = arith.mulf %59, %41 : vector<4x1xf32>
    %61 = arith.subf %47, %60 : vector<4x1xf32>
    %62 = arith.mulf %56, %44 : vector<4x1xf32>
    %63 = arith.subf %61, %62 : vector<4x1xf32>
    %cst_38 = arith.constant 6.400000e+01 : f32
    %64 = vector.broadcast %cst_38 : f32 to vector<4x1xf32>
    %65 = arith.mulf %64, %56 : vector<4x1xf32>
    %66 = arith.mulf %65, %59 : vector<4x1xf32>
    %67 = arith.addf %63, %66 : vector<4x1xf32>
    %cst_39 = arith.constant 2.000000e+00 : f32
    %68 = vector.broadcast %cst_39 : f32 to vector<4x1xf32>
    %69 = arith.mulf %68, %56 : vector<4x1xf32>
    %70 = arith.mulf %69, %41 : vector<4x1xf32>
    %71 = arith.subf %50, %70 : vector<4x1xf32>
    %cst_40 = arith.constant 6.400000e+01 : f32
    %72 = vector.broadcast %cst_40 : f32 to vector<4x1xf32>
    %73 = arith.mulf %72, %56 : vector<4x1xf32>
    %74 = arith.mulf %73, %56 : vector<4x1xf32>
    %75 = arith.addf %71, %74 : vector<4x1xf32>
    %cst_41 = arith.constant 2.000000e+00 : f32
    %76 = vector.broadcast %cst_41 : f32 to vector<4x1xf32>
    %77 = arith.mulf %76, %59 : vector<4x1xf32>
    %78 = arith.mulf %77, %44 : vector<4x1xf32>
    %79 = arith.subf %53, %78 : vector<4x1xf32>
    %cst_42 = arith.constant 6.400000e+01 : f32
    %80 = vector.broadcast %cst_42 : f32 to vector<4x1xf32>
    %81 = arith.mulf %80, %59 : vector<4x1xf32>
    %82 = arith.mulf %81, %59 : vector<4x1xf32>
    %83 = arith.addf %79, %82 : vector<4x1xf32>
    %84 = vector.extract_strided_slice %29 {offsets = [0, 8], sizes = [4, 8], strides = [1, 1]} : vector<4x16xf32> to vector<4x8xf32>
    %cst_43 = arith.constant dense<0.000000e+00> : vector<4xf32>
    %85 = vector.multi_reduction <add>, %84, %cst_43 [1] : vector<4x8xf32> to vector<4xf32>
    %86 = vector.shape_cast %85 : vector<4xf32> to vector<4x1xf32>
    %87 = vector.extract_strided_slice %30 {offsets = [0, 8], sizes = [4, 8], strides = [1, 1]} : vector<4x16xf32> to vector<4x8xf32>
    %cst_44 = arith.constant dense<0.000000e+00> : vector<4xf32>
    %88 = vector.multi_reduction <add>, %87, %cst_44 [1] : vector<4x8xf32> to vector<4xf32>
    %89 = vector.shape_cast %88 : vector<4xf32> to vector<4x1xf32>
    %90 = vector.extract_strided_slice %32 {offsets = [0, 8], sizes = [4, 8], strides = [1, 1]} : vector<4x16xf32> to vector<4x8xf32>
    %cst_45 = arith.constant dense<0.000000e+00> : vector<4xf32>
    %91 = vector.multi_reduction <add>, %90, %cst_45 [1] : vector<4x8xf32> to vector<4xf32>
    %92 = vector.shape_cast %91 : vector<4xf32> to vector<4x1xf32>
    %93 = vector.extract_strided_slice %34 {offsets = [0, 8], sizes = [4, 8], strides = [1, 1]} : vector<4x16xf32> to vector<4x8xf32>
    %cst_46 = arith.constant dense<0.000000e+00> : vector<4xf32>
    %94 = vector.multi_reduction <add>, %93, %cst_46 [1] : vector<4x8xf32> to vector<4xf32>
    %95 = vector.shape_cast %94 : vector<4xf32> to vector<4x1xf32>
    %96 = vector.extract_strided_slice %36 {offsets = [0, 8], sizes = [4, 8], strides = [1, 1]} : vector<4x16xf32> to vector<4x8xf32>
    %cst_47 = arith.constant dense<0.000000e+00> : vector<4xf32>
    %97 = vector.multi_reduction <add>, %96, %cst_47 [1] : vector<4x8xf32> to vector<4xf32>
    %98 = vector.shape_cast %97 : vector<4xf32> to vector<4x1xf32>
    %99 = vector.extract_strided_slice %37 {offsets = [0, 8], sizes = [4, 8], strides = [1, 1]} : vector<4x16xf32> to vector<4x8xf32>
    %cst_48 = arith.constant dense<0x7F800000> : vector<4xf32>
    %100 = vector.multi_reduction <minimumf>, %99, %cst_48 [1] : vector<4x8xf32> to vector<4xf32>
    %101 = vector.shape_cast %100 : vector<4xf32> to vector<4x1xf32>
    %102 = vector.extract_strided_slice %38 {offsets = [0, 8], sizes = [4, 8], strides = [1, 1]} : vector<4x16xf32> to vector<4x8xf32>
    %cst_49 = arith.constant dense<0x7F800000> : vector<4xf32>
    %103 = vector.multi_reduction <minimumf>, %102, %cst_49 [1] : vector<4x8xf32> to vector<4xf32>
    %104 = vector.shape_cast %103 : vector<4xf32> to vector<4x1xf32>
    %105 = arith.mulf %104, %86 : vector<4x1xf32>
    %106 = arith.subf %92, %105 : vector<4x1xf32>
    %107 = arith.mulf %101, %89 : vector<4x1xf32>
    %108 = arith.subf %106, %107 : vector<4x1xf32>
    %cst_50 = arith.constant 6.400000e+01 : f32
    %109 = vector.broadcast %cst_50 : f32 to vector<4x1xf32>
    %110 = arith.mulf %109, %101 : vector<4x1xf32>
    %111 = arith.mulf %110, %104 : vector<4x1xf32>
    %112 = arith.addf %108, %111 : vector<4x1xf32>
    %cst_51 = arith.constant 2.000000e+00 : f32
    %113 = vector.broadcast %cst_51 : f32 to vector<4x1xf32>
    %114 = arith.mulf %113, %101 : vector<4x1xf32>
    %115 = arith.mulf %114, %86 : vector<4x1xf32>
    %116 = arith.subf %95, %115 : vector<4x1xf32>
    %cst_52 = arith.constant 6.400000e+01 : f32
    %117 = vector.broadcast %cst_52 : f32 to vector<4x1xf32>
    %118 = arith.mulf %117, %101 : vector<4x1xf32>
    %119 = arith.mulf %118, %101 : vector<4x1xf32>
    %120 = arith.addf %116, %119 : vector<4x1xf32>
    %cst_53 = arith.constant 2.000000e+00 : f32
    %121 = vector.broadcast %cst_53 : f32 to vector<4x1xf32>
    %122 = arith.mulf %121, %104 : vector<4x1xf32>
    %123 = arith.mulf %122, %89 : vector<4x1xf32>
    %124 = arith.subf %98, %123 : vector<4x1xf32>
    %cst_54 = arith.constant 6.400000e+01 : f32
    %125 = vector.broadcast %cst_54 : f32 to vector<4x1xf32>
    %126 = arith.mulf %125, %104 : vector<4x1xf32>
    %127 = arith.mulf %126, %104 : vector<4x1xf32>
    %128 = arith.addf %124, %127 : vector<4x1xf32>
    %129 = tpu.concatenate %67, %112 in 1 : vector<4x1xf32>, vector<4x1xf32> -> vector<4x2xf32>
    %130 = tpu.concatenate %75, %120 in 1 : vector<4x1xf32>, vector<4x1xf32> -> vector<4x2xf32>
    %131 = tpu.concatenate %83, %128 in 1 : vector<4x1xf32>, vector<4x1xf32> -> vector<4x2xf32>
    %cst_55 = arith.constant dense<0.000000e+00> : vector<4x16xf32>
    %132 = vector.multi_reduction <add>, %20, %cst_55 [1] : vector<4x8x16xf32> to vector<4x16xf32>
    %cst_56 = arith.constant dense<0.000000e+00> : vector<4x16xf32>
    %133 = vector.multi_reduction <add>, %28, %cst_56 [1] : vector<4x8x16xf32> to vector<4x16xf32>
    %134 = arith.mulf %20, %28 : vector<4x8x16xf32>
    %cst_57 = arith.constant dense<0.000000e+00> : vector<4x16xf32>
    %135 = vector.multi_reduction <add>, %134, %cst_57 [1] : vector<4x8x16xf32> to vector<4x16xf32>
    %136 = arith.mulf %20, %20 : vector<4x8x16xf32>
    %cst_58 = arith.constant dense<0.000000e+00> : vector<4x16xf32>
    %137 = vector.multi_reduction <add>, %136, %cst_58 [1] : vector<4x8x16xf32> to vector<4x16xf32>
    %138 = arith.mulf %28, %28 : vector<4x8x16xf32>
    %cst_59 = arith.constant dense<0.000000e+00> : vector<4x16xf32>
    %139 = vector.multi_reduction <add>, %138, %cst_59 [1] : vector<4x8x16xf32> to vector<4x16xf32>
    %cst_60 = arith.constant dense<0x7F800000> : vector<4x16xf32>
    %140 = vector.multi_reduction <minimumf>, %20, %cst_60 [1] : vector<4x8x16xf32> to vector<4x16xf32>
    %cst_61 = arith.constant dense<0x7F800000> : vector<4x16xf32>
    %141 = vector.multi_reduction <minimumf>, %28, %cst_61 [1] : vector<4x8x16xf32> to vector<4x16xf32>
    %142 = vector.extract_strided_slice %132 {offsets = [0, 0], sizes = [4, 8], strides = [1, 1]} : vector<4x16xf32> to vector<4x8xf32>
    %cst_62 = arith.constant dense<0.000000e+00> : vector<4xf32>
    %143 = vector.multi_reduction <add>, %142, %cst_62 [1] : vector<4x8xf32> to vector<4xf32>
    %144 = vector.shape_cast %143 : vector<4xf32> to vector<4x1xf32>
    %145 = vector.extract_strided_slice %133 {offsets = [0, 0], sizes = [4, 8], strides = [1, 1]} : vector<4x16xf32> to vector<4x8xf32>
    %cst_63 = arith.constant dense<0.000000e+00> : vector<4xf32>
    %146 = vector.multi_reduction <add>, %145, %cst_63 [1] : vector<4x8xf32> to vector<4xf32>
    %147 = vector.shape_cast %146 : vector<4xf32> to vector<4x1xf32>
    %148 = vector.extract_strided_slice %135 {offsets = [0, 0], sizes = [4, 8], strides = [1, 1]} : vector<4x16xf32> to vector<4x8xf32>
    %cst_64 = arith.constant dense<0.000000e+00> : vector<4xf32>
    %149 = vector.multi_reduction <add>, %148, %cst_64 [1] : vector<4x8xf32> to vector<4xf32>
    %150 = vector.shape_cast %149 : vector<4xf32> to vector<4x1xf32>
    %151 = vector.extract_strided_slice %137 {offsets = [0, 0], sizes = [4, 8], strides = [1, 1]} : vector<4x16xf32> to vector<4x8xf32>
    %cst_65 = arith.constant dense<0.000000e+00> : vector<4xf32>
    %152 = vector.multi_reduction <add>, %151, %cst_65 [1] : vector<4x8xf32> to vector<4xf32>
    %153 = vector.shape_cast %152 : vector<4xf32> to vector<4x1xf32>
    %154 = vector.extract_strided_slice %139 {offsets = [0, 0], sizes = [4, 8], strides = [1, 1]} : vector<4x16xf32> to vector<4x8xf32>
    %cst_66 = arith.constant dense<0.000000e+00> : vector<4xf32>
    %155 = vector.multi_reduction <add>, %154, %cst_66 [1] : vector<4x8xf32> to vector<4xf32>
    %156 = vector.shape_cast %155 : vector<4xf32> to vector<4x1xf32>
    %157 = vector.extract_strided_slice %140 {offsets = [0, 0], sizes = [4, 8], strides = [1, 1]} : vector<4x16xf32> to vector<4x8xf32>
    %cst_67 = arith.constant dense<0x7F800000> : vector<4xf32>
    %158 = vector.multi_reduction <minimumf>, %157, %cst_67 [1] : vector<4x8xf32> to vector<4xf32>
    %159 = vector.shape_cast %158 : vector<4xf32> to vector<4x1xf32>
    %160 = vector.extract_strided_slice %141 {offsets = [0, 0], sizes = [4, 8], strides = [1, 1]} : vector<4x16xf32> to vector<4x8xf32>
    %cst_68 = arith.constant dense<0x7F800000> : vector<4xf32>
    %161 = vector.multi_reduction <minimumf>, %160, %cst_68 [1] : vector<4x8xf32> to vector<4xf32>
    %162 = vector.shape_cast %161 : vector<4xf32> to vector<4x1xf32>
    %163 = arith.mulf %162, %144 : vector<4x1xf32>
    %164 = arith.subf %150, %163 : vector<4x1xf32>
    %165 = arith.mulf %159, %147 : vector<4x1xf32>
    %166 = arith.subf %164, %165 : vector<4x1xf32>
    %cst_69 = arith.constant 6.400000e+01 : f32
    %167 = vector.broadcast %cst_69 : f32 to vector<4x1xf32>
    %168 = arith.mulf %167, %159 : vector<4x1xf32>
    %169 = arith.mulf %168, %162 : vector<4x1xf32>
    %170 = arith.addf %166, %169 : vector<4x1xf32>
    %cst_70 = arith.constant 2.000000e+00 : f32
    %171 = vector.broadcast %cst_70 : f32 to vector<4x1xf32>
    %172 = arith.mulf %171, %159 : vector<4x1xf32>
    %173 = arith.mulf %172, %144 : vector<4x1xf32>
    %174 = arith.subf %153, %173 : vector<4x1xf32>
    %cst_71 = arith.constant 6.400000e+01 : f32
    %175 = vector.broadcast %cst_71 : f32 to vector<4x1xf32>
    %176 = arith.mulf %175, %159 : vector<4x1xf32>
    %177 = arith.mulf %176, %159 : vector<4x1xf32>
    %178 = arith.addf %174, %177 : vector<4x1xf32>
    %cst_72 = arith.constant 2.000000e+00 : f32
    %179 = vector.broadcast %cst_72 : f32 to vector<4x1xf32>
    %180 = arith.mulf %179, %162 : vector<4x1xf32>
    %181 = arith.mulf %180, %147 : vector<4x1xf32>
    %182 = arith.subf %156, %181 : vector<4x1xf32>
    %cst_73 = arith.constant 6.400000e+01 : f32
    %183 = vector.broadcast %cst_73 : f32 to vector<4x1xf32>
    %184 = arith.mulf %183, %162 : vector<4x1xf32>
    %185 = arith.mulf %184, %162 : vector<4x1xf32>
    %186 = arith.addf %182, %185 : vector<4x1xf32>
    %187 = vector.extract_strided_slice %132 {offsets = [0, 8], sizes = [4, 8], strides = [1, 1]} : vector<4x16xf32> to vector<4x8xf32>
    %cst_74 = arith.constant dense<0.000000e+00> : vector<4xf32>
    %188 = vector.multi_reduction <add>, %187, %cst_74 [1] : vector<4x8xf32> to vector<4xf32>
    %189 = vector.shape_cast %188 : vector<4xf32> to vector<4x1xf32>
    %190 = vector.extract_strided_slice %133 {offsets = [0, 8], sizes = [4, 8], strides = [1, 1]} : vector<4x16xf32> to vector<4x8xf32>
    %cst_75 = arith.constant dense<0.000000e+00> : vector<4xf32>
    %191 = vector.multi_reduction <add>, %190, %cst_75 [1] : vector<4x8xf32> to vector<4xf32>
    %192 = vector.shape_cast %191 : vector<4xf32> to vector<4x1xf32>
    %193 = vector.extract_strided_slice %135 {offsets = [0, 8], sizes = [4, 8], strides = [1, 1]} : vector<4x16xf32> to vector<4x8xf32>
    %cst_76 = arith.constant dense<0.000000e+00> : vector<4xf32>
    %194 = vector.multi_reduction <add>, %193, %cst_76 [1] : vector<4x8xf32> to vector<4xf32>
    %195 = vector.shape_cast %194 : vector<4xf32> to vector<4x1xf32>
    %196 = vector.extract_strided_slice %137 {offsets = [0, 8], sizes = [4, 8], strides = [1, 1]} : vector<4x16xf32> to vector<4x8xf32>
    %cst_77 = arith.constant dense<0.000000e+00> : vector<4xf32>
    %197 = vector.multi_reduction <add>, %196, %cst_77 [1] : vector<4x8xf32> to vector<4xf32>
    %198 = vector.shape_cast %197 : vector<4xf32> to vector<4x1xf32>
    %199 = vector.extract_strided_slice %139 {offsets = [0, 8], sizes = [4, 8], strides = [1, 1]} : vector<4x16xf32> to vector<4x8xf32>
    %cst_78 = arith.constant dense<0.000000e+00> : vector<4xf32>
    %200 = vector.multi_reduction <add>, %199, %cst_78 [1] : vector<4x8xf32> to vector<4xf32>
    %201 = vector.shape_cast %200 : vector<4xf32> to vector<4x1xf32>
    %202 = vector.extract_strided_slice %140 {offsets = [0, 8], sizes = [4, 8], strides = [1, 1]} : vector<4x16xf32> to vector<4x8xf32>
    %cst_79 = arith.constant dense<0x7F800000> : vector<4xf32>
    %203 = vector.multi_reduction <minimumf>, %202, %cst_79 [1] : vector<4x8xf32> to vector<4xf32>
    %204 = vector.shape_cast %203 : vector<4xf32> to vector<4x1xf32>
    %205 = vector.extract_strided_slice %141 {offsets = [0, 8], sizes = [4, 8], strides = [1, 1]} : vector<4x16xf32> to vector<4x8xf32>
    %cst_80 = arith.constant dense<0x7F800000> : vector<4xf32>
    %206 = vector.multi_reduction <minimumf>, %205, %cst_80 [1] : vector<4x8xf32> to vector<4xf32>
    %207 = vector.shape_cast %206 : vector<4xf32> to vector<4x1xf32>
    %208 = arith.mulf %207, %189 : vector<4x1xf32>
    %209 = arith.subf %195, %208 : vector<4x1xf32>
    %210 = arith.mulf %204, %192 : vector<4x1xf32>
    %211 = arith.subf %209, %210 : vector<4x1xf32>
    %cst_81 = arith.constant 6.400000e+01 : f32
    %212 = vector.broadcast %cst_81 : f32 to vector<4x1xf32>
    %213 = arith.mulf %212, %204 : vector<4x1xf32>
    %214 = arith.mulf %213, %207 : vector<4x1xf32>
    %215 = arith.addf %211, %214 : vector<4x1xf32>
    %cst_82 = arith.constant 2.000000e+00 : f32
    %216 = vector.broadcast %cst_82 : f32 to vector<4x1xf32>
    %217 = arith.mulf %216, %204 : vector<4x1xf32>
    %218 = arith.mulf %217, %189 : vector<4x1xf32>
    %219 = arith.subf %198, %218 : vector<4x1xf32>
    %cst_83 = arith.constant 6.400000e+01 : f32
    %220 = vector.broadcast %cst_83 : f32 to vector<4x1xf32>
    %221 = arith.mulf %220, %204 : vector<4x1xf32>
    %222 = arith.mulf %221, %204 : vector<4x1xf32>
    %223 = arith.addf %219, %222 : vector<4x1xf32>
    %cst_84 = arith.constant 2.000000e+00 : f32
    %224 = vector.broadcast %cst_84 : f32 to vector<4x1xf32>
    %225 = arith.mulf %224, %207 : vector<4x1xf32>
    %226 = arith.mulf %225, %192 : vector<4x1xf32>
    %227 = arith.subf %201, %226 : vector<4x1xf32>
    %cst_85 = arith.constant 6.400000e+01 : f32
    %228 = vector.broadcast %cst_85 : f32 to vector<4x1xf32>
    %229 = arith.mulf %228, %207 : vector<4x1xf32>
    %230 = arith.mulf %229, %207 : vector<4x1xf32>
    %231 = arith.addf %227, %230 : vector<4x1xf32>
    %232 = tpu.concatenate %170, %215 in 1 : vector<4x1xf32>, vector<4x1xf32> -> vector<4x2xf32>
    %233 = tpu.concatenate %178, %223 in 1 : vector<4x1xf32>, vector<4x1xf32> -> vector<4x2xf32>
    %234 = tpu.concatenate %186, %231 in 1 : vector<4x1xf32>, vector<4x1xf32> -> vector<4x2xf32>
    %235 = vector.shape_cast %129 : vector<4x2xf32> to vector<1x4x2xf32>
    %236 = vector.shape_cast %232 : vector<4x2xf32> to vector<1x4x2xf32>
    %237 = vector.shape_cast %130 : vector<4x2xf32> to vector<1x4x2xf32>
    %238 = vector.shape_cast %233 : vector<4x2xf32> to vector<1x4x2xf32>
    %239 = vector.shape_cast %131 : vector<4x2xf32> to vector<1x4x2xf32>
    %240 = vector.shape_cast %234 : vector<4x2xf32> to vector<1x4x2xf32>
    %241 = tpu.concatenate %235, %236, %237, %238, %239, %240 in 0 : vector<1x4x2xf32>, vector<1x4x2xf32>, vector<1x4x2xf32>, vector<1x4x2xf32>, vector<1x4x2xf32>, vector<1x4x2xf32> -> vector<6x4x2xf32>
    %c0_86 = arith.constant 0 : index
    %c0_87 = arith.constant 0 : index
    %c8_88 = arith.constant 8 : index
    %c0_89 = arith.constant 0 : index
    %242 = vector.load %arg2[%c0_86, %c0_87, %c8_88, %c0_89] : memref<1x4x16x16xf32, #tpu.memory_space<vmem>>, vector<1x4x8x16xf32>
    %243 = vector.shape_cast %242 : vector<1x4x8x16xf32> to vector<4x8x16xf32>
    %c0_90 = arith.constant 0 : index
    %c0_91 = arith.constant 0 : index
    %c8_92 = arith.constant 8 : index
    %c0_93 = arith.constant 0 : index
    %244 = vector.load %arg3[%c0_90, %c0_91, %c8_92, %c0_93] : memref<1x4x16x16xf32, #tpu.memory_space<vmem>>, vector<1x4x8x16xf32>
    %245 = vector.shape_cast %244 : vector<1x4x8x16xf32> to vector<4x8x16xf32>
    %246 = vector.extract_strided_slice %243 {offsets = [0, 0, 1], sizes = [4, 8, 15], strides = [1, 1, 1]} : vector<4x8x16xf32> to vector<4x8x15xf32>
    %247 = tpu.concatenate %246, %0 in 2 : vector<4x8x15xf32>, vector<4x8x1xf32> -> vector<4x8x16xf32>
    %248 = vector.extract_strided_slice %243 {offsets = [0, 1, 0], sizes = [4, 7, 16], strides = [1, 1, 1]} : vector<4x8x16xf32> to vector<4x7x16xf32>
    %249 = tpu.concatenate %248, %2 in 1 : vector<4x7x16xf32>, vector<4x1x16xf32> -> vector<4x8x16xf32>
    %250 = arith.subf %243, %247 : vector<4x8x16xf32>
    %251 = math.absf %250 : vector<4x8x16xf32>
    %252 = arith.subf %243, %249 : vector<4x8x16xf32>
    %253 = math.absf %252 : vector<4x8x16xf32>
    %254 = vector.extract_strided_slice %245 {offsets = [0, 0, 1], sizes = [4, 8, 15], strides = [1, 1, 1]} : vector<4x8x16xf32> to vector<4x8x15xf32>
    %255 = tpu.concatenate %254, %0 in 2 : vector<4x8x15xf32>, vector<4x8x1xf32> -> vector<4x8x16xf32>
    %256 = vector.extract_strided_slice %245 {offsets = [0, 1, 0], sizes = [4, 7, 16], strides = [1, 1, 1]} : vector<4x8x16xf32> to vector<4x7x16xf32>
    %257 = tpu.concatenate %256, %4 in 1 : vector<4x7x16xf32>, vector<4x1x16xf32> -> vector<4x8x16xf32>
    %258 = arith.subf %245, %255 : vector<4x8x16xf32>
    %259 = math.absf %258 : vector<4x8x16xf32>
    %260 = arith.subf %245, %257 : vector<4x8x16xf32>
    %261 = math.absf %260 : vector<4x8x16xf32>
    %cst_94 = arith.constant dense<0.000000e+00> : vector<4x16xf32>
    %262 = vector.multi_reduction <add>, %251, %cst_94 [1] : vector<4x8x16xf32> to vector<4x16xf32>
    %cst_95 = arith.constant dense<0.000000e+00> : vector<4x16xf32>
    %263 = vector.multi_reduction <add>, %259, %cst_95 [1] : vector<4x8x16xf32> to vector<4x16xf32>
    %264 = arith.mulf %251, %259 : vector<4x8x16xf32>
    %cst_96 = arith.constant dense<0.000000e+00> : vector<4x16xf32>
    %265 = vector.multi_reduction <add>, %264, %cst_96 [1] : vector<4x8x16xf32> to vector<4x16xf32>
    %266 = arith.mulf %251, %251 : vector<4x8x16xf32>
    %cst_97 = arith.constant dense<0.000000e+00> : vector<4x16xf32>
    %267 = vector.multi_reduction <add>, %266, %cst_97 [1] : vector<4x8x16xf32> to vector<4x16xf32>
    %268 = arith.mulf %259, %259 : vector<4x8x16xf32>
    %cst_98 = arith.constant dense<0.000000e+00> : vector<4x16xf32>
    %269 = vector.multi_reduction <add>, %268, %cst_98 [1] : vector<4x8x16xf32> to vector<4x16xf32>
    %cst_99 = arith.constant dense<0x7F800000> : vector<4x16xf32>
    %270 = vector.multi_reduction <minimumf>, %251, %cst_99 [1] : vector<4x8x16xf32> to vector<4x16xf32>
    %cst_100 = arith.constant dense<0x7F800000> : vector<4x16xf32>
    %271 = vector.multi_reduction <minimumf>, %259, %cst_100 [1] : vector<4x8x16xf32> to vector<4x16xf32>
    %272 = vector.extract_strided_slice %262 {offsets = [0, 0], sizes = [4, 8], strides = [1, 1]} : vector<4x16xf32> to vector<4x8xf32>
    %cst_101 = arith.constant dense<0.000000e+00> : vector<4xf32>
    %273 = vector.multi_reduction <add>, %272, %cst_101 [1] : vector<4x8xf32> to vector<4xf32>
    %274 = vector.shape_cast %273 : vector<4xf32> to vector<4x1xf32>
    %275 = vector.extract_strided_slice %263 {offsets = [0, 0], sizes = [4, 8], strides = [1, 1]} : vector<4x16xf32> to vector<4x8xf32>
    %cst_102 = arith.constant dense<0.000000e+00> : vector<4xf32>
    %276 = vector.multi_reduction <add>, %275, %cst_102 [1] : vector<4x8xf32> to vector<4xf32>
    %277 = vector.shape_cast %276 : vector<4xf32> to vector<4x1xf32>
    %278 = vector.extract_strided_slice %265 {offsets = [0, 0], sizes = [4, 8], strides = [1, 1]} : vector<4x16xf32> to vector<4x8xf32>
    %cst_103 = arith.constant dense<0.000000e+00> : vector<4xf32>
    %279 = vector.multi_reduction <add>, %278, %cst_103 [1] : vector<4x8xf32> to vector<4xf32>
    %280 = vector.shape_cast %279 : vector<4xf32> to vector<4x1xf32>
    %281 = vector.extract_strided_slice %267 {offsets = [0, 0], sizes = [4, 8], strides = [1, 1]} : vector<4x16xf32> to vector<4x8xf32>
    %cst_104 = arith.constant dense<0.000000e+00> : vector<4xf32>
    %282 = vector.multi_reduction <add>, %281, %cst_104 [1] : vector<4x8xf32> to vector<4xf32>
    %283 = vector.shape_cast %282 : vector<4xf32> to vector<4x1xf32>
    %284 = vector.extract_strided_slice %269 {offsets = [0, 0], sizes = [4, 8], strides = [1, 1]} : vector<4x16xf32> to vector<4x8xf32>
    %cst_105 = arith.constant dense<0.000000e+00> : vector<4xf32>
    %285 = vector.multi_reduction <add>, %284, %cst_105 [1] : vector<4x8xf32> to vector<4xf32>
    %286 = vector.shape_cast %285 : vector<4xf32> to vector<4x1xf32>
    %287 = vector.extract_strided_slice %270 {offsets = [0, 0], sizes = [4, 8], strides = [1, 1]} : vector<4x16xf32> to vector<4x8xf32>
    %cst_106 = arith.constant dense<0x7F800000> : vector<4xf32>
    %288 = vector.multi_reduction <minimumf>, %287, %cst_106 [1] : vector<4x8xf32> to vector<4xf32>
    %289 = vector.shape_cast %288 : vector<4xf32> to vector<4x1xf32>
    %290 = vector.extract_strided_slice %271 {offsets = [0, 0], sizes = [4, 8], strides = [1, 1]} : vector<4x16xf32> to vector<4x8xf32>
    %cst_107 = arith.constant dense<0x7F800000> : vector<4xf32>
    %291 = vector.multi_reduction <minimumf>, %290, %cst_107 [1] : vector<4x8xf32> to vector<4xf32>
    %292 = vector.shape_cast %291 : vector<4xf32> to vector<4x1xf32>
    %293 = arith.mulf %292, %274 : vector<4x1xf32>
    %294 = arith.subf %280, %293 : vector<4x1xf32>
    %295 = arith.mulf %289, %277 : vector<4x1xf32>
    %296 = arith.subf %294, %295 : vector<4x1xf32>
    %cst_108 = arith.constant 6.400000e+01 : f32
    %297 = vector.broadcast %cst_108 : f32 to vector<4x1xf32>
    %298 = arith.mulf %297, %289 : vector<4x1xf32>
    %299 = arith.mulf %298, %292 : vector<4x1xf32>
    %300 = arith.addf %296, %299 : vector<4x1xf32>
    %cst_109 = arith.constant 2.000000e+00 : f32
    %301 = vector.broadcast %cst_109 : f32 to vector<4x1xf32>
    %302 = arith.mulf %301, %289 : vector<4x1xf32>
    %303 = arith.mulf %302, %274 : vector<4x1xf32>
    %304 = arith.subf %283, %303 : vector<4x1xf32>
    %cst_110 = arith.constant 6.400000e+01 : f32
    %305 = vector.broadcast %cst_110 : f32 to vector<4x1xf32>
    %306 = arith.mulf %305, %289 : vector<4x1xf32>
    %307 = arith.mulf %306, %289 : vector<4x1xf32>
    %308 = arith.addf %304, %307 : vector<4x1xf32>
    %cst_111 = arith.constant 2.000000e+00 : f32
    %309 = vector.broadcast %cst_111 : f32 to vector<4x1xf32>
    %310 = arith.mulf %309, %292 : vector<4x1xf32>
    %311 = arith.mulf %310, %277 : vector<4x1xf32>
    %312 = arith.subf %286, %311 : vector<4x1xf32>
    %cst_112 = arith.constant 6.400000e+01 : f32
    %313 = vector.broadcast %cst_112 : f32 to vector<4x1xf32>
    %314 = arith.mulf %313, %292 : vector<4x1xf32>
    %315 = arith.mulf %314, %292 : vector<4x1xf32>
    %316 = arith.addf %312, %315 : vector<4x1xf32>
    %317 = vector.extract_strided_slice %262 {offsets = [0, 8], sizes = [4, 8], strides = [1, 1]} : vector<4x16xf32> to vector<4x8xf32>
    %cst_113 = arith.constant dense<0.000000e+00> : vector<4xf32>
    %318 = vector.multi_reduction <add>, %317, %cst_113 [1] : vector<4x8xf32> to vector<4xf32>
    %319 = vector.shape_cast %318 : vector<4xf32> to vector<4x1xf32>
    %320 = vector.extract_strided_slice %263 {offsets = [0, 8], sizes = [4, 8], strides = [1, 1]} : vector<4x16xf32> to vector<4x8xf32>
    %cst_114 = arith.constant dense<0.000000e+00> : vector<4xf32>
    %321 = vector.multi_reduction <add>, %320, %cst_114 [1] : vector<4x8xf32> to vector<4xf32>
    %322 = vector.shape_cast %321 : vector<4xf32> to vector<4x1xf32>
    %323 = vector.extract_strided_slice %265 {offsets = [0, 8], sizes = [4, 8], strides = [1, 1]} : vector<4x16xf32> to vector<4x8xf32>
    %cst_115 = arith.constant dense<0.000000e+00> : vector<4xf32>
    %324 = vector.multi_reduction <add>, %323, %cst_115 [1] : vector<4x8xf32> to vector<4xf32>
    %325 = vector.shape_cast %324 : vector<4xf32> to vector<4x1xf32>
    %326 = vector.extract_strided_slice %267 {offsets = [0, 8], sizes = [4, 8], strides = [1, 1]} : vector<4x16xf32> to vector<4x8xf32>
    %cst_116 = arith.constant dense<0.000000e+00> : vector<4xf32>
    %327 = vector.multi_reduction <add>, %326, %cst_116 [1] : vector<4x8xf32> to vector<4xf32>
    %328 = vector.shape_cast %327 : vector<4xf32> to vector<4x1xf32>
    %329 = vector.extract_strided_slice %269 {offsets = [0, 8], sizes = [4, 8], strides = [1, 1]} : vector<4x16xf32> to vector<4x8xf32>
    %cst_117 = arith.constant dense<0.000000e+00> : vector<4xf32>
    %330 = vector.multi_reduction <add>, %329, %cst_117 [1] : vector<4x8xf32> to vector<4xf32>
    %331 = vector.shape_cast %330 : vector<4xf32> to vector<4x1xf32>
    %332 = vector.extract_strided_slice %270 {offsets = [0, 8], sizes = [4, 8], strides = [1, 1]} : vector<4x16xf32> to vector<4x8xf32>
    %cst_118 = arith.constant dense<0x7F800000> : vector<4xf32>
    %333 = vector.multi_reduction <minimumf>, %332, %cst_118 [1] : vector<4x8xf32> to vector<4xf32>
    %334 = vector.shape_cast %333 : vector<4xf32> to vector<4x1xf32>
    %335 = vector.extract_strided_slice %271 {offsets = [0, 8], sizes = [4, 8], strides = [1, 1]} : vector<4x16xf32> to vector<4x8xf32>
    %cst_119 = arith.constant dense<0x7F800000> : vector<4xf32>
    %336 = vector.multi_reduction <minimumf>, %335, %cst_119 [1] : vector<4x8xf32> to vector<4xf32>
    %337 = vector.shape_cast %336 : vector<4xf32> to vector<4x1xf32>
    %338 = arith.mulf %337, %319 : vector<4x1xf32>
    %339 = arith.subf %325, %338 : vector<4x1xf32>
    %340 = arith.mulf %334, %322 : vector<4x1xf32>
    %341 = arith.subf %339, %340 : vector<4x1xf32>
    %cst_120 = arith.constant 6.400000e+01 : f32
    %342 = vector.broadcast %cst_120 : f32 to vector<4x1xf32>
    %343 = arith.mulf %342, %334 : vector<4x1xf32>
    %344 = arith.mulf %343, %337 : vector<4x1xf32>
    %345 = arith.addf %341, %344 : vector<4x1xf32>
    %cst_121 = arith.constant 2.000000e+00 : f32
    %346 = vector.broadcast %cst_121 : f32 to vector<4x1xf32>
    %347 = arith.mulf %346, %334 : vector<4x1xf32>
    %348 = arith.mulf %347, %319 : vector<4x1xf32>
    %349 = arith.subf %328, %348 : vector<4x1xf32>
    %cst_122 = arith.constant 6.400000e+01 : f32
    %350 = vector.broadcast %cst_122 : f32 to vector<4x1xf32>
    %351 = arith.mulf %350, %334 : vector<4x1xf32>
    %352 = arith.mulf %351, %334 : vector<4x1xf32>
    %353 = arith.addf %349, %352 : vector<4x1xf32>
    %cst_123 = arith.constant 2.000000e+00 : f32
    %354 = vector.broadcast %cst_123 : f32 to vector<4x1xf32>
    %355 = arith.mulf %354, %337 : vector<4x1xf32>
    %356 = arith.mulf %355, %322 : vector<4x1xf32>
    %357 = arith.subf %331, %356 : vector<4x1xf32>
    %cst_124 = arith.constant 6.400000e+01 : f32
    %358 = vector.broadcast %cst_124 : f32 to vector<4x1xf32>
    %359 = arith.mulf %358, %337 : vector<4x1xf32>
    %360 = arith.mulf %359, %337 : vector<4x1xf32>
    %361 = arith.addf %357, %360 : vector<4x1xf32>
    %362 = tpu.concatenate %300, %345 in 1 : vector<4x1xf32>, vector<4x1xf32> -> vector<4x2xf32>
    %363 = tpu.concatenate %308, %353 in 1 : vector<4x1xf32>, vector<4x1xf32> -> vector<4x2xf32>
    %364 = tpu.concatenate %316, %361 in 1 : vector<4x1xf32>, vector<4x1xf32> -> vector<4x2xf32>
    %cst_125 = arith.constant dense<0.000000e+00> : vector<4x16xf32>
    %365 = vector.multi_reduction <add>, %253, %cst_125 [1] : vector<4x8x16xf32> to vector<4x16xf32>
    %cst_126 = arith.constant dense<0.000000e+00> : vector<4x16xf32>
    %366 = vector.multi_reduction <add>, %261, %cst_126 [1] : vector<4x8x16xf32> to vector<4x16xf32>
    %367 = arith.mulf %253, %261 : vector<4x8x16xf32>
    %cst_127 = arith.constant dense<0.000000e+00> : vector<4x16xf32>
    %368 = vector.multi_reduction <add>, %367, %cst_127 [1] : vector<4x8x16xf32> to vector<4x16xf32>
    %369 = arith.mulf %253, %253 : vector<4x8x16xf32>
    %cst_128 = arith.constant dense<0.000000e+00> : vector<4x16xf32>
    %370 = vector.multi_reduction <add>, %369, %cst_128 [1] : vector<4x8x16xf32> to vector<4x16xf32>
    %371 = arith.mulf %261, %261 : vector<4x8x16xf32>
    %cst_129 = arith.constant dense<0.000000e+00> : vector<4x16xf32>
    %372 = vector.multi_reduction <add>, %371, %cst_129 [1] : vector<4x8x16xf32> to vector<4x16xf32>
    %cst_130 = arith.constant dense<0x7F800000> : vector<4x16xf32>
    %373 = vector.multi_reduction <minimumf>, %253, %cst_130 [1] : vector<4x8x16xf32> to vector<4x16xf32>
    %cst_131 = arith.constant dense<0x7F800000> : vector<4x16xf32>
    %374 = vector.multi_reduction <minimumf>, %261, %cst_131 [1] : vector<4x8x16xf32> to vector<4x16xf32>
    %375 = vector.extract_strided_slice %365 {offsets = [0, 0], sizes = [4, 8], strides = [1, 1]} : vector<4x16xf32> to vector<4x8xf32>
    %cst_132 = arith.constant dense<0.000000e+00> : vector<4xf32>
    %376 = vector.multi_reduction <add>, %375, %cst_132 [1] : vector<4x8xf32> to vector<4xf32>
    %377 = vector.shape_cast %376 : vector<4xf32> to vector<4x1xf32>
    %378 = vector.extract_strided_slice %366 {offsets = [0, 0], sizes = [4, 8], strides = [1, 1]} : vector<4x16xf32> to vector<4x8xf32>
    %cst_133 = arith.constant dense<0.000000e+00> : vector<4xf32>
    %379 = vector.multi_reduction <add>, %378, %cst_133 [1] : vector<4x8xf32> to vector<4xf32>
    %380 = vector.shape_cast %379 : vector<4xf32> to vector<4x1xf32>
    %381 = vector.extract_strided_slice %368 {offsets = [0, 0], sizes = [4, 8], strides = [1, 1]} : vector<4x16xf32> to vector<4x8xf32>
    %cst_134 = arith.constant dense<0.000000e+00> : vector<4xf32>
    %382 = vector.multi_reduction <add>, %381, %cst_134 [1] : vector<4x8xf32> to vector<4xf32>
    %383 = vector.shape_cast %382 : vector<4xf32> to vector<4x1xf32>
    %384 = vector.extract_strided_slice %370 {offsets = [0, 0], sizes = [4, 8], strides = [1, 1]} : vector<4x16xf32> to vector<4x8xf32>
    %cst_135 = arith.constant dense<0.000000e+00> : vector<4xf32>
    %385 = vector.multi_reduction <add>, %384, %cst_135 [1] : vector<4x8xf32> to vector<4xf32>
    %386 = vector.shape_cast %385 : vector<4xf32> to vector<4x1xf32>
    %387 = vector.extract_strided_slice %372 {offsets = [0, 0], sizes = [4, 8], strides = [1, 1]} : vector<4x16xf32> to vector<4x8xf32>
    %cst_136 = arith.constant dense<0.000000e+00> : vector<4xf32>
    %388 = vector.multi_reduction <add>, %387, %cst_136 [1] : vector<4x8xf32> to vector<4xf32>
    %389 = vector.shape_cast %388 : vector<4xf32> to vector<4x1xf32>
    %390 = vector.extract_strided_slice %373 {offsets = [0, 0], sizes = [4, 8], strides = [1, 1]} : vector<4x16xf32> to vector<4x8xf32>
    %cst_137 = arith.constant dense<0x7F800000> : vector<4xf32>
    %391 = vector.multi_reduction <minimumf>, %390, %cst_137 [1] : vector<4x8xf32> to vector<4xf32>
    %392 = vector.shape_cast %391 : vector<4xf32> to vector<4x1xf32>
    %393 = vector.extract_strided_slice %374 {offsets = [0, 0], sizes = [4, 8], strides = [1, 1]} : vector<4x16xf32> to vector<4x8xf32>
    %cst_138 = arith.constant dense<0x7F800000> : vector<4xf32>
    %394 = vector.multi_reduction <minimumf>, %393, %cst_138 [1] : vector<4x8xf32> to vector<4xf32>
    %395 = vector.shape_cast %394 : vector<4xf32> to vector<4x1xf32>
    %396 = arith.mulf %395, %377 : vector<4x1xf32>
    %397 = arith.subf %383, %396 : vector<4x1xf32>
    %398 = arith.mulf %392, %380 : vector<4x1xf32>
    %399 = arith.subf %397, %398 : vector<4x1xf32>
    %cst_139 = arith.constant 6.400000e+01 : f32
    %400 = vector.broadcast %cst_139 : f32 to vector<4x1xf32>
    %401 = arith.mulf %400, %392 : vector<4x1xf32>
    %402 = arith.mulf %401, %395 : vector<4x1xf32>
    %403 = arith.addf %399, %402 : vector<4x1xf32>
    %cst_140 = arith.constant 2.000000e+00 : f32
    %404 = vector.broadcast %cst_140 : f32 to vector<4x1xf32>
    %405 = arith.mulf %404, %392 : vector<4x1xf32>
    %406 = arith.mulf %405, %377 : vector<4x1xf32>
    %407 = arith.subf %386, %406 : vector<4x1xf32>
    %cst_141 = arith.constant 6.400000e+01 : f32
    %408 = vector.broadcast %cst_141 : f32 to vector<4x1xf32>
    %409 = arith.mulf %408, %392 : vector<4x1xf32>
    %410 = arith.mulf %409, %392 : vector<4x1xf32>
    %411 = arith.addf %407, %410 : vector<4x1xf32>
    %cst_142 = arith.constant 2.000000e+00 : f32
    %412 = vector.broadcast %cst_142 : f32 to vector<4x1xf32>
    %413 = arith.mulf %412, %395 : vector<4x1xf32>
    %414 = arith.mulf %413, %380 : vector<4x1xf32>
    %415 = arith.subf %389, %414 : vector<4x1xf32>
    %cst_143 = arith.constant 6.400000e+01 : f32
    %416 = vector.broadcast %cst_143 : f32 to vector<4x1xf32>
    %417 = arith.mulf %416, %395 : vector<4x1xf32>
    %418 = arith.mulf %417, %395 : vector<4x1xf32>
    %419 = arith.addf %415, %418 : vector<4x1xf32>
    %420 = vector.extract_strided_slice %365 {offsets = [0, 8], sizes = [4, 8], strides = [1, 1]} : vector<4x16xf32> to vector<4x8xf32>
    %cst_144 = arith.constant dense<0.000000e+00> : vector<4xf32>
    %421 = vector.multi_reduction <add>, %420, %cst_144 [1] : vector<4x8xf32> to vector<4xf32>
    %422 = vector.shape_cast %421 : vector<4xf32> to vector<4x1xf32>
    %423 = vector.extract_strided_slice %366 {offsets = [0, 8], sizes = [4, 8], strides = [1, 1]} : vector<4x16xf32> to vector<4x8xf32>
    %cst_145 = arith.constant dense<0.000000e+00> : vector<4xf32>
    %424 = vector.multi_reduction <add>, %423, %cst_145 [1] : vector<4x8xf32> to vector<4xf32>
    %425 = vector.shape_cast %424 : vector<4xf32> to vector<4x1xf32>
    %426 = vector.extract_strided_slice %368 {offsets = [0, 8], sizes = [4, 8], strides = [1, 1]} : vector<4x16xf32> to vector<4x8xf32>
    %cst_146 = arith.constant dense<0.000000e+00> : vector<4xf32>
    %427 = vector.multi_reduction <add>, %426, %cst_146 [1] : vector<4x8xf32> to vector<4xf32>
    %428 = vector.shape_cast %427 : vector<4xf32> to vector<4x1xf32>
    %429 = vector.extract_strided_slice %370 {offsets = [0, 8], sizes = [4, 8], strides = [1, 1]} : vector<4x16xf32> to vector<4x8xf32>
    %cst_147 = arith.constant dense<0.000000e+00> : vector<4xf32>
    %430 = vector.multi_reduction <add>, %429, %cst_147 [1] : vector<4x8xf32> to vector<4xf32>
    %431 = vector.shape_cast %430 : vector<4xf32> to vector<4x1xf32>
    %432 = vector.extract_strided_slice %372 {offsets = [0, 8], sizes = [4, 8], strides = [1, 1]} : vector<4x16xf32> to vector<4x8xf32>
    %cst_148 = arith.constant dense<0.000000e+00> : vector<4xf32>
    %433 = vector.multi_reduction <add>, %432, %cst_148 [1] : vector<4x8xf32> to vector<4xf32>
    %434 = vector.shape_cast %433 : vector<4xf32> to vector<4x1xf32>
    %435 = vector.extract_strided_slice %373 {offsets = [0, 8], sizes = [4, 8], strides = [1, 1]} : vector<4x16xf32> to vector<4x8xf32>
    %cst_149 = arith.constant dense<0x7F800000> : vector<4xf32>
    %436 = vector.multi_reduction <minimumf>, %435, %cst_149 [1] : vector<4x8xf32> to vector<4xf32>
    %437 = vector.shape_cast %436 : vector<4xf32> to vector<4x1xf32>
    %438 = vector.extract_strided_slice %374 {offsets = [0, 8], sizes = [4, 8], strides = [1, 1]} : vector<4x16xf32> to vector<4x8xf32>
    %cst_150 = arith.constant dense<0x7F800000> : vector<4xf32>
    %439 = vector.multi_reduction <minimumf>, %438, %cst_150 [1] : vector<4x8xf32> to vector<4xf32>
    %440 = vector.shape_cast %439 : vector<4xf32> to vector<4x1xf32>
    %441 = arith.mulf %440, %422 : vector<4x1xf32>
    %442 = arith.subf %428, %441 : vector<4x1xf32>
    %443 = arith.mulf %437, %425 : vector<4x1xf32>
    %444 = arith.subf %442, %443 : vector<4x1xf32>
    %cst_151 = arith.constant 6.400000e+01 : f32
    %445 = vector.broadcast %cst_151 : f32 to vector<4x1xf32>
    %446 = arith.mulf %445, %437 : vector<4x1xf32>
    %447 = arith.mulf %446, %440 : vector<4x1xf32>
    %448 = arith.addf %444, %447 : vector<4x1xf32>
    %cst_152 = arith.constant 2.000000e+00 : f32
    %449 = vector.broadcast %cst_152 : f32 to vector<4x1xf32>
    %450 = arith.mulf %449, %437 : vector<4x1xf32>
    %451 = arith.mulf %450, %422 : vector<4x1xf32>
    %452 = arith.subf %431, %451 : vector<4x1xf32>
    %cst_153 = arith.constant 6.400000e+01 : f32
    %453 = vector.broadcast %cst_153 : f32 to vector<4x1xf32>
    %454 = arith.mulf %453, %437 : vector<4x1xf32>
    %455 = arith.mulf %454, %437 : vector<4x1xf32>
    %456 = arith.addf %452, %455 : vector<4x1xf32>
    %cst_154 = arith.constant 2.000000e+00 : f32
    %457 = vector.broadcast %cst_154 : f32 to vector<4x1xf32>
    %458 = arith.mulf %457, %440 : vector<4x1xf32>
    %459 = arith.mulf %458, %425 : vector<4x1xf32>
    %460 = arith.subf %434, %459 : vector<4x1xf32>
    %cst_155 = arith.constant 6.400000e+01 : f32
    %461 = vector.broadcast %cst_155 : f32 to vector<4x1xf32>
    %462 = arith.mulf %461, %440 : vector<4x1xf32>
    %463 = arith.mulf %462, %440 : vector<4x1xf32>
    %464 = arith.addf %460, %463 : vector<4x1xf32>
    %465 = tpu.concatenate %403, %448 in 1 : vector<4x1xf32>, vector<4x1xf32> -> vector<4x2xf32>
    %466 = tpu.concatenate %411, %456 in 1 : vector<4x1xf32>, vector<4x1xf32> -> vector<4x2xf32>
    %467 = tpu.concatenate %419, %464 in 1 : vector<4x1xf32>, vector<4x1xf32> -> vector<4x2xf32>
    %468 = vector.shape_cast %362 : vector<4x2xf32> to vector<1x4x2xf32>
    %469 = vector.shape_cast %465 : vector<4x2xf32> to vector<1x4x2xf32>
    %470 = vector.shape_cast %363 : vector<4x2xf32> to vector<1x4x2xf32>
    %471 = vector.shape_cast %466 : vector<4x2xf32> to vector<1x4x2xf32>
    %472 = vector.shape_cast %364 : vector<4x2xf32> to vector<1x4x2xf32>
    %473 = vector.shape_cast %467 : vector<4x2xf32> to vector<1x4x2xf32>
    %474 = tpu.concatenate %468, %469, %470, %471, %472, %473 in 0 : vector<1x4x2xf32>, vector<1x4x2xf32>, vector<1x4x2xf32>, vector<1x4x2xf32>, vector<1x4x2xf32>, vector<1x4x2xf32> -> vector<6x4x2xf32>
    %475 = vector.shape_cast %241 : vector<6x4x2xf32> to vector<1x6x4x2xf32>
    %476 = vector.shape_cast %474 : vector<6x4x2xf32> to vector<1x6x4x2xf32>
    %477 = tpu.concatenate %475, %476 in 0 : vector<1x6x4x2xf32>, vector<1x6x4x2xf32> -> vector<2x6x4x2xf32>
    %c0_156 = arith.constant 0 : index
    %c0_157 = arith.constant 0 : index
    %c0_158 = arith.constant 0 : index
    %c0_159 = arith.constant 0 : index
    %c0_160 = arith.constant 0 : index
    %478 = vector.load %arg6[%c0_156, %c0_157, %c0_158, %c0_159, %c0_160] : memref<1x2x6x4x2xf32, #tpu.memory_space<vmem>>, vector<1x2x6x4x2xf32>
    %479 = vector.shape_cast %478 : vector<1x2x6x4x2xf32> to vector<2x6x4x2xf32>
    %480 = vector.shape_cast %477 : vector<2x6x4x2xf32> to vector<1x2x6x4x2xf32>
    tpu.vector_store %arg6[%c0_156, %c0_157, %c0_158, %c0_159, %c0_160], %480 {strides = array<i32>} : memref<1x2x6x4x2xf32, #tpu.memory_space<vmem>>, vector<1x2x6x4x2xf32>,
    return
  }
  func.func @transform_0(%arg0: i32, %arg1: i32) -> (i32, i32, i32, i32) {
    %c0_i32 = arith.constant 0 : i32
    %c0_i32_0 = arith.constant 0 : i32
    %c0_i32_1 = arith.constant 0 : i32
    return %arg0, %c0_i32, %arg1, %c0_i32_0 : i32, i32, i32, i32
  }
  func.func @transform_1(%arg0: i32, %arg1: i32) -> (i32, i32, i32, i32) {
    %c0_i32 = arith.constant 0 : i32
    %c0_i32_0 = arith.constant 0 : i32
    %c0_i32_1 = arith.constant 0 : i32
    return %arg0, %c0_i32, %arg1, %c0_i32_0 : i32, i32, i32, i32
  }
  func.func @transform_2(%arg0: i32, %arg1: i32) -> (i32, i32, i32, i32, i32) {
    %c0_i32 = arith.constant 0 : i32
    %c0_i32_0 = arith.constant 0 : i32
    %c0_i32_1 = arith.constant 0 : i32
    %c0_i32_2 = arith.constant 0 : i32
    return %arg0, %arg1, %c0_i32, %c0_i32_0, %c0_i32_1 : i32, i32, i32, i32, i32
  }
  func.func @transform_3(%arg0: i32, %arg1: i32) -> (i32, i32, i32, i32, i32) {
    %c0_i32 = arith.constant 0 : i32
    %c0_i32_0 = arith.constant 0 : i32
    %c0_i32_1 = arith.constant 0 : i32
    %c0_i32_2 = arith.constant 0 : i32
    return %arg0, %arg1, %c0_i32, %c0_i32_0, %c0_i32_1 : i32, i32, i32, i32, i32
  }
  func.func @transform_4(%arg0: i32, %arg1: i32) -> (i32, i32, i32, i32, i32) {
    %c0_i32 = arith.constant 0 : i32
    %c0_i32_0 = arith.constant 0 : i32
    %c0_i32_1 = arith.constant 0 : i32
    %c0_i32_2 = arith.constant 0 : i32
    return %arg0, %arg1, %c0_i32, %c0_i32_0, %c0_i32_1 : i32, i32, i32, i32, i32
  }
}

</mosaic_0001>

<llo_original>
// kernel: _lambda_.1
$region0: #{_lambda_.1}
  #allocation0 [shape = 'u32[]', space=smem, size = 0x4, offset = 0x4, fixed_abs, tag = 'smem constant byte address 0x4 - core index']
  #allocation1 [shape = 'u32[144,128]{1,0:T(1,128)}', space=vmem, size = 0x12000, scoped, tag = 'internal scratch']
  %s0 = inlined_call_operand.hbm [shape: f32[2,4,16,16], index: 0, kind: input, shape index: {}]
  %s1 = inlined_call_operand.hbm [shape: f32[2,4,16,16], index: 1, kind: input, shape index: {}]
  %s2 = inlined_call_operand.vmem [shape: f32[2,1,4,1,16], index: 2, kind: input, shape index: {}, may-alias: {2,3}]
  %s3 = inlined_call_operand.vmem [shape: f32[2,1,4,1,16], index: 3, kind: input, shape index: {}, may-alias: {2,3}]
  %s4 = inlined_call_operand.vmem [shape: f32[2,2,6,4,2], index: 4, kind: output, shape index: {}]
  %s5 = sld [smem:[#allocation0]]
  $region57: #{_lambda_.1} parent=0
    _
  %s7 = ssub.s32 1, %s5
  %s8 = scalar_select 0, %s7, %s5
  $region1: #{_lambda_.1} parent=0
    #allocation2 [shape = 'u8[65536]{0}', space=vmem, size = 0x10000, scoped, tag = 'input window, operand 0']
    #allocation3 [shape = 's32[2]{0}', space=sflag, size = 0x8, scoped, tag = 'scoped memory for _lambda_.1']
    #allocation4 [shape = 'u8[65536]{0}', space=vmem, size = 0x10000, scoped, tag = 'input window, operand 1']
    #allocation5 [shape = 's32[2]{0}', space=sflag, size = 0x8, scoped, tag = 'scoped memory for _lambda_.1']
    %9 = vsyncpa [#allocation3], 0
    %s10 = scalar_lea.sflag [#allocation3], 1
    %11 = vsyncpa %s10, 0
    %12 = vsyncpa [#allocation5], 0
    %s13 = scalar_lea.sflag [#allocation5], 1
    %14 = vsyncpa %s13, 0
    loop: start=0, step=1, limit=4
    $region2: #{_lambda_.1} parent=1 // loop_pre_header
      _
    $region3: #{_lambda_.1} parent=1 // loop_header
      %s16 = sphi 0, %s20
      %p17 = scmp.ge.s32.totalorder %s16, 4
      %s23 = sphi 0, %s35
      %s24 = sphi 0, %s31
      %s25 = sphi 0, %s23
      %s26 = sphi 0, %s24
      %s27 = sphi 0, %s25
      %s28 = sphi 0, %s26
      %s40 = sphi 0, %s42
      %s43 = sphi 0, %s40
      %s44 = sphi 0, %s43
      %s60 = sphi 0, %s44
      %s68 = sphi 0, %s70
      %s71 = sphi 0, %s68
      %s72 = sphi 0, %s71
      %s88 = sphi 0, %s72
      %s96 = sphi 0, %s98
      %s99 = sphi 0, %s96
      %s100 = sphi 0, %s99
      %s116 = sphi 0, %s100
      %s124 = sphi 0, %s126
      %s127 = sphi 0, %s124
      %s128 = sphi 0, %s127
      %s144 = sphi 0, %s128
      %s152 = sphi 0, %s154
      %s155 = sphi 0, %s152
      %s156 = sphi 0, %s155
      %s172 = sphi 0, %s156
    $region4: #{_lambda_.1} parent=1 // loop_header_branch
      %19 = sbr.rel (%p17) target = $region8
    $region5: #{_lambda_.1} parent=1 // loop_body
      %s21 = ssub.s32 %s16, 1
      %s22 = ssub.s32 %s16, 2
      %s29 = sadd.s32 1, %s24
      %p30 = scmp.ge.s32.totalorder %s29, 1
      %s31 = scalar_select %p30, 0, %s29
      %s32 = sadd.s32 1, %s23
      %s33 = scalar_select %p30, %s32, %s23
      %p34 = scmp.ge.s32.totalorder %s33, 2
      %s35 = scalar_select %p34, 0, %s33
      %s36 = ssub.s32 %s23, %s35
      %s37 = ssub.s32 %s24, %s31
      %s38 = sor.u32 %s36, %s37
      %p39 = scmp.eq.s32.totalorder %s38, 0
      %s41 = sadd.s32 %s40, 1
      %s42 = scalar_select %p39, %s40, %s41
      %p45 = pneg %p39
      %p46 = scmp.eq.s32.totalorder %s16, 1
      %p47 = por %p45, %p46
      %p48 = scmp.ne.s32.totalorder %s40, %s43
      %p49 = scmp.eq.s32.totalorder %s16, 0
      %p50 = por %p48, %p49
      %p51 = scmp.ne.s32.totalorder %s40, %s43
      %p52 = scmp.eq.s32.totalorder %s21, 1
      %p53 = por %p51, %p52
      %p54 = scmp.ne.s32.totalorder %s43, %s44
      %p55 = scmp.eq.s32.totalorder %s21, 0
      %p56 = por %p54, %p55
      %p57 = scmp.ne.s32.totalorder %s43, %s44
      %p58 = scmp.eq.s32.totalorder %s22, 1
      %p59 = por %p57, %p58
      %p61 = scmp.ne.s32.totalorder %s44, %s60
      %p62 = scmp.eq.s32.totalorder %s22, 0
      %p63 = por %p61, %p62
      %s64 = ssub.s32 %s23, %s35
      %s65 = ssub.s32 %s24, %s31
      %s66 = sor.u32 %s64, %s65
      %p67 = scmp.eq.s32.totalorder %s66, 0
      %s69 = sadd.s32 %s68, 1
      %s70 = scalar_select %p67, %s68, %s69
      %p73 = pneg %p67
      %p74 = scmp.eq.s32.totalorder %s16, 1
      %p75 = por %p73, %p74
      %p76 = scmp.ne.s32.totalorder %s68, %s71
      %p77 = scmp.eq.s32.totalorder %s16, 0
      %p78 = por %p76, %p77
      %p79 = scmp.ne.s32.totalorder %s68, %s71
      %p80 = scmp.eq.s32.totalorder %s21, 1
      %p81 = por %p79, %p80
      %p82 = scmp.ne.s32.totalorder %s71, %s72
      %p83 = scmp.eq.s32.totalorder %s21, 0
      %p84 = por %p82, %p83
      %p85 = scmp.ne.s32.totalorder %s71, %s72
      %p86 = scmp.eq.s32.totalorder %s22, 1
      %p87 = por %p85, %p86
      %p89 = scmp.ne.s32.totalorder %s72, %s88
      %p90 = scmp.eq.s32.totalorder %s22, 0
      %p91 = por %p89, %p90
      %s92 = ssub.s32 %s23, %s35
      %s93 = ssub.s32 %s24, %s31
      %s94 = sor.u32 %s92, %s93
      %p95 = scmp.eq.s32.totalorder %s94, 0
      %s97 = sadd.s32 %s96, 1
      %s98 = scalar_select %p95, %s96, %s97
      %p101 = pneg %p95
      %p102 = scmp.eq.s32.totalorder %s16, 1
      %p103 = por %p101, %p102
      %p104 = scmp.ne.s32.totalorder %s96, %s99
      %p105 = scmp.eq.s32.totalorder %s16, 0
      %p106 = por %p104, %p105
      %p107 = scmp.ne.s32.totalorder %s96, %s99
      %p108 = scmp.eq.s32.totalorder %s21, 1
      %p109 = por %p107, %p108
      %p110 = scmp.ne.s32.totalorder %s99, %s100
      %p111 = scmp.eq.s32.totalorder %s21, 0
      %p112 = por %p110, %p111
      %p113 = scmp.ne.s32.totalorder %s99, %s100
      %p114 = scmp.eq.s32.totalorder %s22, 1
      %p115 = por %p113, %p114
      %p117 = scmp.ne.s32.totalorder %s100, %s116
      %p118 = scmp.eq.s32.totalorder %s22, 0
      %p119 = por %p117, %p118
      %s120 = ssub.s32 %s23, %s35
      %s121 = ssub.s32 %s24, %s31
      %s122 = sor.u32 %s120, %s121
      %p123 = scmp.eq.s32.totalorder %s122, 0
      %s125 = sadd.s32 %s124, 1
      %s126 = scalar_select %p123, %s124, %s125
      %p129 = pneg %p123
      %p130 = scmp.eq.s32.totalorder %s16, 1
      %p131 = por %p129, %p130
      %p132 = scmp.ne.s32.totalorder %s124, %s127
      %p133 = scmp.eq.s32.totalorder %s16, 0
      %p134 = por %p132, %p133
      %p135 = scmp.ne.s32.totalorder %s124, %s127
      %p136 = scmp.eq.s32.totalorder %s21, 1
      %p137 = por %p135, %p136
      %p138 = scmp.ne.s32.totalorder %s127, %s128
      %p139 = scmp.eq.s32.totalorder %s21, 0
      %p140 = por %p138, %p139
      %p141 = scmp.ne.s32.totalorder %s127, %s128
      %p142 = scmp.eq.s32.totalorder %s22, 1
      %p143 = por %p141, %p142
      %p145 = scmp.ne.s32.totalorder %s128, %s144
      %p146 = scmp.eq.s32.totalorder %s22, 0
      %p147 = por %p145, %p146
      %s148 = ssub.s32 %s23, %s35
      %s149 = ssub.s32 %s24, %s31
      %s150 = sor.u32 %s148, %s149
      %p151 = scmp.eq.s32.totalorder %s150, 0
      %s153 = sadd.s32 %s152, 1
      %s154 = scalar_select %p151, %s152, %s153
      %p157 = pneg %p151
      %p158 = scmp.eq.s32.totalorder %s16, 1
      %p159 = por %p157, %p158
      %p160 = scmp.ne.s32.totalorder %s152, %s155
      %p161 = scmp.eq.s32.totalorder %s16, 0
      %p162 = por %p160, %p161
      %p163 = scmp.ne.s32.totalorder %s152, %s155
      %p164 = scmp.eq.s32.totalorder %s21, 1
      %p165 = por %p163, %p164
      %p166 = scmp.ne.s32.totalorder %s155, %s156
      %p167 = scmp.eq.s32.totalorder %s21, 0
      %p168 = por %p166, %p167
      %p169 = scmp.ne.s32.totalorder %s155, %s156
      %p170 = scmp.eq.s32.totalorder %s22, 1
      %p171 = por %p169, %p170
      %p173 = scmp.ne.s32.totalorder %s156, %s172
      %p174 = scmp.eq.s32.totalorder %s22, 0
      %p175 = por %p173, %p174
      %p176 = scmp.le.s32.totalorder 1, %s16
      %p177 = scmp.lt.s32.totalorder %s16, 3
      %p178 = pnand %p176, %p177
      %p179 = pneg %p178
      // Predicated region
      $region9: #{_lambda_.1} parent=5 // pred_check
        _
      $region10: #{_lambda_.1} parent=5 // pred_check_branch
        %181 = sbr.rel (%p178) target = $region12
      $region11: #{_lambda_.1} parent=5 // pred_region
        %s182 = ssub.s32 %s16, 1
      $region12: #{_lambda_.1} parent=5 // pred_fallthru
        _
      %p183 = scmp.lt.s32.totalorder %s16, 2
      // Predicated region
      $region13: #{_lambda_.1} parent=5 // pred_check
        %p184 = pneg %p183
      $region14: #{_lambda_.1} parent=5 // pred_check_branch
        %186 = sbr.rel (%p184) target = $region16
      $region15: #{_lambda_.1} parent=5 // pred_region
        // Predicated region
        $region17: #{_lambda_.1} parent=15 // pred_check
          %p187 = pneg %p50
        $region18: #{_lambda_.1} parent=15 // pred_check_branch
          %189 = sbr.rel (%p187) target = $region20
        $region19: #{_lambda_.1} parent=15 // pred_region
          %s190 = sand.u32 %s40, 1
          %s191 = scalar_lea.sflag [#allocation3], %s190
          %s192 = sand.u32 %s40, 1
          %s193 = smul.addr %s192, 64
          %s194 = scalar_lea.vmem [#allocation2], %s193
          %s195 = smul.u32 2, %s24
          %s197 = ssub.s32 1024, 1024
          %198 = vsyncadd %s191, %s197
          %s199 = smul.addr %s23, 8
          %s200 = sadd.s32 %s195, %s199
          %s201 = smul.addr %s200, 128
          %s202 = scalar_lea.hbm %s0, %s201
          %s203 = sshll.u32 %s194, 4
          %s204 = int_to_ptr.vmem [resolvable:$true] %s203
          %209 = dma.hbm_to_vmem [thread:$0]  %s202, 1024, %s204, %s191, 128, 128, 8
        $region20: #{_lambda_.1} parent=15 // pred_fallthru
          _
        // Predicated region
        $region21: #{_lambda_.1} parent=15 // pred_check
          %p210 = pneg %p78
        $region22: #{_lambda_.1} parent=15 // pred_check_branch
          %212 = sbr.rel (%p210) target = $region24
        $region23: #{_lambda_.1} parent=15 // pred_region
          %s213 = sand.u32 %s68, 1
          %s214 = scalar_lea.sflag [#allocation5], %s213
          %s215 = sand.u32 %s68, 1
          %s216 = smul.addr %s215, 64
          %s217 = scalar_lea.vmem [#allocation4], %s216
          %s218 = smul.u32 2, %s24
          %s220 = ssub.s32 1024, 1024
          %221 = vsyncadd %s214, %s220
          %s222 = smul.addr %s23, 8
          %s223 = sadd.s32 %s218, %s222
          %s224 = smul.addr %s223, 128
          %s225 = scalar_lea.hbm %s1, %s224
          %s226 = sshll.u32 %s217, 4
          %s227 = int_to_ptr.vmem [resolvable:$true] %s226
          %232 = dma.hbm_to_vmem [thread:$0]  %s225, 1024, %s227, %s214, 128, 128, 8
        $region24: #{_lambda_.1} parent=15 // pred_fallthru
          _
        // Predicated region
        $region25: #{_lambda_.1} parent=15 // pred_check
          %p233 = pneg %p106
        $region26: #{_lambda_.1} parent=15 // pred_check_branch
          %235 = sbr.rel (%p233) target = $region28
        $region27: #{_lambda_.1} parent=15 // pred_region
          %p236 = scmp.lt.s32.totalorder %s23, 1
          %s237 = scalar_select %p236, %s23, 1
          %p238 = scmp.lt.s32.totalorder %s24, 0
          %s239 = scalar_select %p238, %s24, 0
          %s240 = smul.addr %s239, 4
          %s241 = smul.addr %s237, 4
          %s242 = sadd.s32 %s240, %s241
          %s243 = scalar_lea.vmem %s2, %s242
        $region28: #{_lambda_.1} parent=15 // pred_fallthru
          _
        // Predicated region
        $region29: #{_lambda_.1} parent=15 // pred_check
          %p244 = pneg %p134
        $region30: #{_lambda_.1} parent=15 // pred_check_branch
          %246 = sbr.rel (%p244) target = $region32
        $region31: #{_lambda_.1} parent=15 // pred_region
          %p247 = scmp.lt.s32.totalorder %s23, 1
          %s248 = scalar_select %p247, %s23, 1
          %p249 = scmp.lt.s32.totalorder %s24, 0
          %s250 = scalar_select %p249, %s24, 0
          %s251 = smul.addr %s250, 4
          %s252 = smul.addr %s248, 4
          %s253 = sadd.s32 %s251, %s252
          %s254 = scalar_lea.vmem %s3, %s253
        $region32: #{_lambda_.1} parent=15 // pred_fallthru
          _
      $region16: #{_lambda_.1} parent=5 // pred_fallthru
        _
      %p255 = scmp.le.s32.totalorder 1, %s16
      %p256 = scmp.lt.s32.totalorder %s16, 3
      %p257 = pnand %p255, %p256
      %p258 = pneg %p257
      // Predicated region
      $region33: #{_lambda_.1} parent=5 // pred_check
        _
      $region34: #{_lambda_.1} parent=5 // pred_check_branch
        %260 = sbr.rel (%p257) target = $region36
      $region35: #{_lambda_.1} parent=5 // pred_region
        %s261 = ssub.s32 %s16, 1
        %s262 = sand.u32 %s43, 1
        %s263 = scalar_lea.sflag [#allocation3], %s262
        %s264 = sand.u32 %s43, 1
        %s265 = smul.addr %s264, 64
        %s266 = scalar_lea.vmem [#allocation2], %s265
        // Predicated region
        $region37: #{_lambda_.1} parent=35 // pred_check
          %p267 = pneg %p56
        $region38: #{_lambda_.1} parent=35 // pred_check_branch
          %269 = sbr.rel (%p267) target = $region40
        $region39: #{_lambda_.1} parent=35 // pred_region
          %270 = dma.done %s263, 1024
        $region40: #{_lambda_.1} parent=35 // pred_fallthru
          _
        %s271 = sand.u32 %s71, 1
        %s272 = scalar_lea.sflag [#allocation5], %s271
        %s273 = sand.u32 %s71, 1
        %s274 = smul.addr %s273, 64
        %s275 = scalar_lea.vmem [#allocation4], %s274
        // Predicated region
        $region41: #{_lambda_.1} parent=35 // pred_check
          %p276 = pneg %p84
        $region42: #{_lambda_.1} parent=35 // pred_check_branch
          %278 = sbr.rel (%p276) target = $region44
        $region43: #{_lambda_.1} parent=35 // pred_region
          %279 = dma.done %s272, 1024
        $region44: #{_lambda_.1} parent=35 // pred_fallthru
          _
        %s280 = sand.u32 %s43, 1
        %s281 = scalar_lea.sflag [#allocation3], %s280
        %s282 = sand.u32 %s43, 1
        %s283 = smul.addr %s282, 64
        %s284 = scalar_lea.vmem [#allocation2], %s283
        %p285 = pneg %p56
        %p286 = pneg %p53
        %s287 = sand.u32 %s71, 1
        %s288 = scalar_lea.sflag [#allocation5], %s287
        %s289 = sand.u32 %s71, 1
        %s290 = smul.addr %s289, 64
        %s291 = scalar_lea.vmem [#allocation4], %s290
        %p292 = pneg %p84
        %p293 = pneg %p81
        %p294 = scmp.lt.s32.totalorder %s25, 1
        %s295 = scalar_select %p294, %s25, 1
        %p296 = scmp.lt.s32.totalorder %s26, 0
        %s297 = scalar_select %p296, %s26, 0
        %s298 = smul.addr %s297, 4
        %s299 = smul.addr %s295, 4
        %s300 = sadd.s32 %s298, %s299
        %s301 = scalar_lea.vmem %s2, %s300
        %p302 = pneg %p112
        %p303 = pneg %p109
        %p304 = scmp.lt.s32.totalorder %s25, 1
        %s305 = scalar_select %p304, %s25, 1
        %p306 = scmp.lt.s32.totalorder %s26, 0
        %s307 = scalar_select %p306, %s26, 0
        %s308 = smul.addr %s307, 4
        %s309 = smul.addr %s305, 4
        %s310 = sadd.s32 %s308, %s309
        %s311 = scalar_lea.vmem %s3, %s310
        %p312 = pneg %p140
        %p313 = pneg %p137
        %p314 = pneg %p168
        %p315 = pneg %p165
        %s316 = smul.u32 2, %s26
        %p317 = scmp.lt.s32.totalorder %s25, 1
        %s318 = scalar_select %p317, %s25, 1
        %p319 = scmp.lt.s32.totalorder %s316, 1
        %s320 = scalar_select %p319, %s316, 1
        %s321 = smul.addr %s320, 6
        %s322 = smul.addr %s318, 12
        %s323 = sadd.s32 %s321, %s322
        %s324 = smul.addr %s323, 4
        %s325 = scalar_lea.vmem %s4, %s324
        %s326 = smul.u32 2, %s26
        %s327 = smul.u32 2, %s26
        %p328 = scmp.lt.s32.totalorder %s25, 1
        %s329 = scalar_select %p328, %s25, 1
        %p330 = scmp.lt.s32.totalorder %s26, 0
        %s331 = scalar_select %p330, %s26, 0
        %s332 = smul.addr %s331, 4
        %s333 = smul.addr %s329, 4
        %s334 = sadd.s32 %s332, %s333
        %s335 = scalar_lea.vmem %s2, %s334
        %p336 = scmp.lt.s32.totalorder %s25, 1
        %s337 = scalar_select %p336, %s25, 1
        %p338 = scmp.lt.s32.totalorder %s26, 0
        %s339 = scalar_select %p338, %s26, 0
        %s340 = smul.addr %s339, 4
        %s341 = smul.addr %s337, 4
        %s342 = sadd.s32 %s340, %s341
        %s343 = scalar_lea.vmem %s3, %s342
        %s344 = smul.u32 2, %s26
        %p345 = scmp.lt.s32.totalorder %s25, 1
        %s346 = scalar_select %p345, %s25, 1
        %p347 = scmp.lt.s32.totalorder %s344, 1
        %s348 = scalar_select %p347, %s344, 1
        %s349 = smul.addr %s348, 6
        %s350 = smul.addr %s346, 12
        %s351 = sadd.s32 %s349, %s350
        %s352 = smul.addr %s351, 4
        %s353 = scalar_lea.vmem %s4, %s352
        %s354 = smul.u32 2, %s26
        %v355 = vld [vmem:[%s335] sm:$0x1]
        %v356 = vld [vmem:[%s335 + $0x1] sm:$0x1]
        %v357 = vld [vmem:[%s335 + $0x2] sm:$0x1]
        %v358 = vld [vmem:[%s335 + $0x3] sm:$0x1]
        %v359 = vld [vmem:[%s343] sm:$0x1]
        %v360 = vld [vmem:[%s343 + $0x1] sm:$0x1]
        %v361 = vld [vmem:[%s343 + $0x2] sm:$0x1]
        %v362 = vld [vmem:[%s343 + $0x3] sm:$0x1]
        %v363 = vld [vmem:[%s266] sm:$0xff]
        %v364 = vld [vmem:[%s266 + $0x10] sm:$0xff]
        %v365 = vld [vmem:[%s266 + $0x20] sm:$0xff]
        %v366 = vld [vmem:[%s266 + $0x30] sm:$0xff]
        %v367 = vld [vmem:[%s275] sm:$0xff]
        %v368 = vld [vmem:[%s275 + $0x10] sm:$0xff]
        %v369 = vld [vmem:[%s275 + $0x20] sm:$0xff]
        %v370 = vld [vmem:[%s275 + $0x30] sm:$0xff]
        %v371 = vld [vmem:[%s266 + $0x8] sm:$0x1]
        %v372 = vld [vmem:[%s266 + $0x18] sm:$0x1]
        %v373 = vld [vmem:[%s266 + $0x28] sm:$0x1]
        %v374 = vld [vmem:[%s266 + $0x38] sm:$0x1]
        %v375 = vld [vmem:[%s275 + $0x8] sm:$0x1]
        %v376 = vld [vmem:[%s275 + $0x18] sm:$0x1]
        %v377 = vld [vmem:[%s275 + $0x28] sm:$0x1]
        %v378 = vld [vmem:[%s275 + $0x38] sm:$0x1]
        %383 = vrot.lane.b32.xlu0 %v363, 127
        %v384 = vpop.permute.xlu0 %383
        %385 = vrot.lane.b32.xlu0 %v364, 127
        %v386 = vpop.permute.xlu0 %385
        %387 = vrot.lane.b32.xlu0 %v365, 127
        %v388 = vpop.permute.xlu0 %387
        %389 = vrot.lane.b32.xlu0 %v366, 127
        %v390 = vpop.permute.xlu0 %389
        %vm395 = vcmask 121856
        %v396 = vsel %vm395, %v384, 0.0
        %v397 = vsel %vm395, %v386, 0.0
        %v398 = vsel %vm395, %v388, 0.0
        %v399 = vsel %vm395, %v390, 0.0
        %v400 = vrot.slane %v363, 1
        %v401 = vrot.slane %v364, 1
        %v402 = vrot.slane %v365, 1
        %v403 = vrot.slane %v366, 1
        %v412 = vrot.slane %v371, 1
        %v413 = vrot.slane %v372, 1
        %v414 = vrot.slane %v373, 1
        %v415 = vrot.slane %v374, 1
        %vm420 = vcmask 1046528
        %v421 = vsel %vm420, %v400, %v412
        %v422 = vsel %vm420, %v401, %v413
        %v423 = vsel %vm420, %v402, %v414
        %v424 = vsel %vm420, %v403, %v415
        %v425 = vsub.f32 %v363, %v396
        %v426 = vsub.f32 %v364, %v397
        %v427 = vsub.f32 %v365, %v398
        %v428 = vsub.f32 %v366, %v399
        %v429 = vand.u32 2147483647, %v425
        %v430 = vand.u32 2147483647, %v426
        %v431 = vand.u32 2147483647, %v427
        %v432 = vand.u32 2147483647, %v428
        %v433 = vsub.f32 %v363, %v421
        %v434 = vsub.f32 %v364, %v422
        %v435 = vsub.f32 %v365, %v423
        %v436 = vsub.f32 %v366, %v424
        %v437 = vand.u32 2147483647, %v433
        %v438 = vand.u32 2147483647, %v434
        %v439 = vand.u32 2147483647, %v435
        %v440 = vand.u32 2147483647, %v436
        %445 = vrot.lane.b32.xlu0 %v367, 127
        %v446 = vpop.permute.xlu0 %445
        %447 = vrot.lane.b32.xlu0 %v368, 127
        %v448 = vpop.permute.xlu0 %447
        %449 = vrot.lane.b32.xlu0 %v369, 127
        %v450 = vpop.permute.xlu0 %449
        %451 = vrot.lane.b32.xlu0 %v370, 127
        %v452 = vpop.permute.xlu0 %451
        %v457 = vsel %vm395, %v446, 0.0
        %v458 = vsel %vm395, %v448, 0.0
        %v459 = vsel %vm395, %v450, 0.0
        %v460 = vsel %vm395, %v452, 0.0
        %v461 = vrot.slane %v367, 1
        %v462 = vrot.slane %v368, 1
        %v463 = vrot.slane %v369, 1
        %v464 = vrot.slane %v370, 1
        %v473 = vrot.slane %v375, 1
        %v474 = vrot.slane %v376, 1
        %v475 = vrot.slane %v377, 1
        %v476 = vrot.slane %v378, 1
        %v481 = vsel %vm420, %v461, %v473
        %v482 = vsel %vm420, %v462, %v474
        %v483 = vsel %vm420, %v463, %v475
        %v484 = vsel %vm420, %v464, %v476
        %v485 = vsub.f32 %v367, %v457
        %v486 = vsub.f32 %v368, %v458
        %v487 = vsub.f32 %v369, %v459
        %v488 = vsub.f32 %v370, %v460
        %v489 = vand.u32 2147483647, %v485
        %v490 = vand.u32 2147483647, %v486
        %v491 = vand.u32 2147483647, %v487
        %v492 = vand.u32 2147483647, %v488
        %v493 = vsub.f32 %v367, %v481
        %v494 = vsub.f32 %v368, %v482
        %v495 = vsub.f32 %v369, %v483
        %v496 = vsub.f32 %v370, %v484
        %v497 = vand.u32 2147483647, %v493
        %v498 = vand.u32 2147483647, %v494
        %v499 = vand.u32 2147483647, %v495
        %v500 = vand.u32 2147483647, %v496
        %vm501 = vcmask 130048
        %v502 = vsel %vm501, %v429, 0.0
        %v503 = vrot.slane %v502, 4
        %v504 = vadd.f32 %v502, %v503
        %v505 = vrot.slane %v504, 2
        %v506 = vadd.f32 %v504, %v505
        %v507 = vrot.slane %v506, 1
        %v508 = vadd.f32 %v506, %v507
        %v509 = vsel %vm501, %v430, 0.0
        %v510 = vrot.slane %v509, 4
        %v511 = vadd.f32 %v509, %v510
        %v512 = vrot.slane %v511, 2
        %v513 = vadd.f32 %v511, %v512
        %v514 = vrot.slane %v513, 1
        %v515 = vadd.f32 %v513, %v514
        %v516 = vsel %vm501, %v431, 0.0
        %v517 = vrot.slane %v516, 4
        %v518 = vadd.f32 %v516, %v517
        %v519 = vrot.slane %v518, 2
        %v520 = vadd.f32 %v518, %v519
        %v521 = vrot.slane %v520, 1
        %v522 = vadd.f32 %v520, %v521
        %v523 = vsel %vm501, %v432, 0.0
        %v524 = vrot.slane %v523, 4
        %v525 = vadd.f32 %v523, %v524
        %v526 = vrot.slane %v525, 2
        %v527 = vadd.f32 %v525, %v526
        %v528 = vrot.slane %v527, 1
        %v529 = vadd.f32 %v527, %v528
        %v530 = vsel %vm501, %v489, 0.0
        %v531 = vrot.slane %v530, 4
        %v532 = vadd.f32 %v530, %v531
        %v533 = vrot.slane %v532, 2
        %v534 = vadd.f32 %v532, %v533
        %v535 = vrot.slane %v534, 1
        %v536 = vadd.f32 %v534, %v535
        %v537 = vsel %vm501, %v490, 0.0
        %v538 = vrot.slane %v537, 4
        %v539 = vadd.f32 %v537, %v538
        %v540 = vrot.slane %v539, 2
        %v541 = vadd.f32 %v539, %v540
        %v542 = vrot.slane %v541, 1
        %v543 = vadd.f32 %v541, %v542
        %v544 = vsel %vm501, %v491, 0.0
        %v545 = vrot.slane %v544, 4
        %v546 = vadd.f32 %v544, %v545
        %v547 = vrot.slane %v546, 2
        %v548 = vadd.f32 %v546, %v547
        %v549 = vrot.slane %v548, 1
        %v550 = vadd.f32 %v548, %v549
        %v551 = vsel %vm501, %v492, 0.0
        %v552 = vrot.slane %v551, 4
        %v553 = vadd.f32 %v551, %v552
        %v554 = vrot.slane %v553, 2
        %v555 = vadd.f32 %v553, %v554
        %v556 = vrot.slane %v555, 1
        %v557 = vadd.f32 %v555, %v556
        %v558 = vmul.f32 %v429, %v489
        %v559 = vmul.f32 %v430, %v490
        %v560 = vmul.f32 %v431, %v491
        %v561 = vmul.f32 %v432, %v492
        %v562 = vsel %vm501, %v558, 0.0
        %v563 = vrot.slane %v562, 4
        %v564 = vadd.f32 %v562, %v563
        %v565 = vrot.slane %v564, 2
        %v566 = vadd.f32 %v564, %v565
        %v567 = vrot.slane %v566, 1
        %v568 = vadd.f32 %v566, %v567
        %v569 = vsel %vm501, %v559, 0.0
        %v570 = vrot.slane %v569, 4
        %v571 = vadd.f32 %v569, %v570
        %v572 = vrot.slane %v571, 2
        %v573 = vadd.f32 %v571, %v572
        %v574 = vrot.slane %v573, 1
        %v575 = vadd.f32 %v573, %v574
        %v576 = vsel %vm501, %v560, 0.0
        %v577 = vrot.slane %v576, 4
        %v578 = vadd.f32 %v576, %v577
        %v579 = vrot.slane %v578, 2
        %v580 = vadd.f32 %v578, %v579
        %v581 = vrot.slane %v580, 1
        %v582 = vadd.f32 %v580, %v581
        %v583 = vsel %vm501, %v561, 0.0
        %v584 = vrot.slane %v583, 4
        %v585 = vadd.f32 %v583, %v584
        %v586 = vrot.slane %v585, 2
        %v587 = vadd.f32 %v585, %v586
        %v588 = vrot.slane %v587, 1
        %v589 = vadd.f32 %v587, %v588
        %v590 = vmul.f32 %v429, %v429
        %v591 = vmul.f32 %v430, %v430
        %v592 = vmul.f32 %v431, %v431
        %v593 = vmul.f32 %v432, %v432
        %v594 = vsel %vm501, %v590, 0.0
        %v595 = vrot.slane %v594, 4
        %v596 = vadd.f32 %v594, %v595
        %v597 = vrot.slane %v596, 2
        %v598 = vadd.f32 %v596, %v597
        %v599 = vrot.slane %v598, 1
        %v600 = vadd.f32 %v598, %v599
        %v601 = vsel %vm501, %v591, 0.0
        %v602 = vrot.slane %v601, 4
        %v603 = vadd.f32 %v601, %v602
        %v604 = vrot.slane %v603, 2
        %v605 = vadd.f32 %v603, %v604
        %v606 = vrot.slane %v605, 1
        %v607 = vadd.f32 %v605, %v606
        %v608 = vsel %vm501, %v592, 0.0
        %v609 = vrot.slane %v608, 4
        %v610 = vadd.f32 %v608, %v609
        %v611 = vrot.slane %v610, 2
        %v612 = vadd.f32 %v610, %v611
        %v613 = vrot.slane %v612, 1
        %v614 = vadd.f32 %v612, %v613
        %v615 = vsel %vm501, %v593, 0.0
        %v616 = vrot.slane %v615, 4
        %v617 = vadd.f32 %v615, %v616
        %v618 = vrot.slane %v617, 2
        %v619 = vadd.f32 %v617, %v618
        %v620 = vrot.slane %v619, 1
        %v621 = vadd.f32 %v619, %v620
        %v622 = vmul.f32 %v489, %v489
        %v623 = vmul.f32 %v490, %v490
        %v624 = vmul.f32 %v491, %v491
        %v625 = vmul.f32 %v492, %v492
        %v626 = vsel %vm501, %v622, 0.0
        %v627 = vrot.slane %v626, 4
        %v628 = vadd.f32 %v626, %v627
        %v629 = vrot.slane %v628, 2
        %v630 = vadd.f32 %v628, %v629
        %v631 = vrot.slane %v630, 1
        %v632 = vadd.f32 %v630, %v631
        %v633 = vsel %vm501, %v623, 0.0
        %v634 = vrot.slane %v633, 4
        %v635 = vadd.f32 %v633, %v634
        %v636 = vrot.slane %v635, 2
        %v637 = vadd.f32 %v635, %v636
        %v638 = vrot.slane %v637, 1
        %v639 = vadd.f32 %v637, %v638
        %v640 = vsel %vm501, %v624, 0.0
        %v641 = vrot.slane %v640, 4
        %v642 = vadd.f32 %v640, %v641
        %v643 = vrot.slane %v642, 2
        %v644 = vadd.f32 %v642, %v643
        %v645 = vrot.slane %v644, 1
        %v646 = vadd.f32 %v644, %v645
        %v647 = vsel %vm501, %v625, 0.0
        %v648 = vrot.slane %v647, 4
        %v649 = vadd.f32 %v647, %v648
        %v650 = vrot.slane %v649, 2
        %v651 = vadd.f32 %v649, %v650
        %v652 = vrot.slane %v651, 1
        %v653 = vadd.f32 %v651, %v652
        %v654 = vsel %vm501, %v429, inf
        %v655 = vrot.slane %v654, 4
        %v656 = vmin.f32 %v654, %v655
        %v657 = vrot.slane %v656, 2
        %v658 = vmin.f32 %v656, %v657
        %v659 = vrot.slane %v658, 1
        %v660 = vmin.f32 %v658, %v659
        %v661 = vsel %vm501, %v430, inf
        %v662 = vrot.slane %v661, 4
        %v663 = vmin.f32 %v661, %v662
        %v664 = vrot.slane %v663, 2
        %v665 = vmin.f32 %v663, %v664
        %v666 = vrot.slane %v665, 1
        %v667 = vmin.f32 %v665, %v666
        %v668 = vsel %vm501, %v431, inf
        %v669 = vrot.slane %v668, 4
        %v670 = vmin.f32 %v668, %v669
        %v671 = vrot.slane %v670, 2
        %v672 = vmin.f32 %v670, %v671
        %v673 = vrot.slane %v672, 1
        %v674 = vmin.f32 %v672, %v673
        %v675 = vsel %vm501, %v432, inf
        %v676 = vrot.slane %v675, 4
        %v677 = vmin.f32 %v675, %v676
        %v678 = vrot.slane %v677, 2
        %v679 = vmin.f32 %v677, %v678
        %v680 = vrot.slane %v679, 1
        %v681 = vmin.f32 %v679, %v680
        %v682 = vsel %vm501, %v489, inf
        %v683 = vrot.slane %v682, 4
        %v684 = vmin.f32 %v682, %v683
        %v685 = vrot.slane %v684, 2
        %v686 = vmin.f32 %v684, %v685
        %v687 = vrot.slane %v686, 1
        %v688 = vmin.f32 %v686, %v687
        %v689 = vsel %vm501, %v490, inf
        %v690 = vrot.slane %v689, 4
        %v691 = vmin.f32 %v689, %v690
        %v692 = vrot.slane %v691, 2
        %v693 = vmin.f32 %v691, %v692
        %v694 = vrot.slane %v693, 1
        %v695 = vmin.f32 %v693, %v694
        %v696 = vsel %vm501, %v491, inf
        %v697 = vrot.slane %v696, 4
        %v698 = vmin.f32 %v696, %v697
        %v699 = vrot.slane %v698, 2
        %v700 = vmin.f32 %v698, %v699
        %v701 = vrot.slane %v700, 1
        %v702 = vmin.f32 %v700, %v701
        %v703 = vsel %vm501, %v492, inf
        %v704 = vrot.slane %v703, 4
        %v705 = vmin.f32 %v703, %v704
        %v706 = vrot.slane %v705, 2
        %v707 = vmin.f32 %v705, %v706
        %v708 = vrot.slane %v707, 1
        %v709 = vmin.f32 %v707, %v708
        %vm714 = vcmask 1041409
        %v715 = vsel %vm714, %v515, %v508
        %vm716 = vcmask 1042434
        %v717 = vsel %vm716, %v522, %v715
        %vm718 = vcmask 1043459
        %v719 = vsel %vm718, %v529, %v717
        %vm721 = vcmask 60416
        %v722 = vsel %vm721, %v719, 0.0
        %723 = vadd.xlane.f32.xlu0 %v722
        %v724 = vpop.xlane.xlu0 %723
        %v729 = vsel %vm714, %v543, %v536
        %v730 = vsel %vm716, %v550, %v729
        %v731 = vsel %vm718, %v557, %v730
        %v733 = vsel %vm721, %v731, 0.0
        %734 = vadd.xlane.f32.xlu0 %v733
        %v735 = vpop.xlane.xlu0 %734
        %v740 = vsel %vm714, %v575, %v568
        %v741 = vsel %vm716, %v582, %v740
        %v742 = vsel %vm718, %v589, %v741
        %v744 = vsel %vm721, %v742, 0.0
        %745 = vadd.xlane.f32.xlu0 %v744
        %v746 = vpop.xlane.xlu0 %745
        %v751 = vsel %vm714, %v607, %v600
        %v752 = vsel %vm716, %v614, %v751
        %v753 = vsel %vm718, %v621, %v752
        %v755 = vsel %vm721, %v753, 0.0
        %756 = vadd.xlane.f32.xlu0 %v755
        %v757 = vpop.xlane.xlu0 %756
        %v762 = vsel %vm714, %v639, %v632
        %v763 = vsel %vm716, %v646, %v762
        %v764 = vsel %vm718, %v653, %v763
        %v766 = vsel %vm721, %v764, 0.0
        %767 = vadd.xlane.f32.xlu0 %v766
        %v768 = vpop.xlane.xlu0 %767
        %v773 = vsel %vm714, %v667, %v660
        %v774 = vsel %vm716, %v674, %v773
        %v775 = vsel %vm718, %v681, %v774
        %v777 = vsel %vm721, %v775, inf
        %778 = vmin.xlane.f32.xlu0 %v777
        %v779 = vpop.xlane.xlu0 %778
        %v784 = vsel %vm714, %v695, %v688
        %v785 = vsel %vm716, %v702, %v784
        %v786 = vsel %vm718, %v709, %v785
        %v788 = vsel %vm721, %v786, inf
        %789 = vmin.xlane.f32.xlu0 %v788
        %v790 = vpop.xlane.xlu0 %789
        %v791 = vmul.f32 %v790, %v724
        %v792 = vsub.f32 %v746, %v791
        %v793 = vmul.f32 %v779, %v735
        %v794 = vsub.f32 %v792, %v793
        %v795 = vmul.f32 %v779, 64.0
        %v796 = vmul.f32 %v795, %v790
        %v797 = vadd.f32 %v794, %v796
        %v798 = vmul.f32 %v779, 2.0
        %v799 = vmul.f32 %v798, %v724
        %v800 = vsub.f32 %v757, %v799
        %v801 = vmul.f32 %v795, %v779
        %v802 = vadd.f32 %v800, %v801
        %v803 = vmul.f32 %v790, 2.0
        %v804 = vmul.f32 %v803, %v735
        %v805 = vsub.f32 %v768, %v804
        %v806 = vmul.f32 %v790, 64.0
        %v807 = vmul.f32 %v806, %v790
        %v808 = vadd.f32 %v805, %v807
        %809 = vrot.lane.b32.xlu0 %v719, 120
        %v810 = vpop.permute.xlu0 %809
        %v812 = vsel %vm721, %v810, 0.0
        %813 = vadd.xlane.f32.xlu0 %v812
        %v814 = vpop.xlane.xlu0 %813
        %815 = vrot.lane.b32.xlu0 %v731, 120
        %v816 = vpop.permute.xlu0 %815
        %v818 = vsel %vm721, %v816, 0.0
        %819 = vadd.xlane.f32.xlu0 %v818
        %v820 = vpop.xlane.xlu0 %819
        %821 = vrot.lane.b32.xlu0 %v742, 120
        %v822 = vpop.permute.xlu0 %821
        %v824 = vsel %vm721, %v822, 0.0
        %825 = vadd.xlane.f32.xlu0 %v824
        %v826 = vpop.xlane.xlu0 %825
        %827 = vrot.lane.b32.xlu0 %v753, 120
        %v828 = vpop.permute.xlu0 %827
        %v830 = vsel %vm721, %v828, 0.0
        %831 = vadd.xlane.f32.xlu0 %v830
        %v832 = vpop.xlane.xlu0 %831
        %833 = vrot.lane.b32.xlu0 %v764, 120
        %v834 = vpop.permute.xlu0 %833
        %v836 = vsel %vm721, %v834, 0.0
        %837 = vadd.xlane.f32.xlu0 %v836
        %v838 = vpop.xlane.xlu0 %837
        %vm839 = vcmask 126016
        %v840 = vsel %vm839, %v775, inf
        %841 = vmin.xlane.f32.xlu0 %v840
        %v842 = vpop.xlane.xlu0 %841
        %v843 = vsel %vm839, %v786, inf
        %844 = vmin.xlane.f32.xlu0 %v843
        %v845 = vpop.xlane.xlu0 %844
        %v846 = vmul.f32 %v845, %v814
        %v847 = vsub.f32 %v826, %v846
        %v848 = vmul.f32 %v842, %v820
        %v849 = vsub.f32 %v847, %v848
        %v850 = vmul.f32 %v842, 64.0
        %v851 = vmul.f32 %v850, %v845
        %v852 = vadd.f32 %v849, %v851
        %v853 = vmul.f32 %v842, 2.0
        %v854 = vmul.f32 %v853, %v814
        %v855 = vsub.f32 %v832, %v854
        %v856 = vmul.f32 %v850, %v842
        %v857 = vadd.f32 %v855, %v856
        %v858 = vmul.f32 %v845, 2.0
        %v859 = vmul.f32 %v858, %v820
        %v860 = vsub.f32 %v838, %v859
        %v861 = vmul.f32 %v845, 64.0
        %v862 = vmul.f32 %v861, %v845
        %v863 = vadd.f32 %v860, %v862
        %vm864 = vcmask 7168
        %v865 = vsel %vm864, %v797, %v852
        %v866 = vsel %vm864, %v802, %v857
        %v867 = vsel %vm864, %v808, %v863
        %v868 = vsel %vm501, %v437, 0.0
        %v869 = vrot.slane %v868, 4
        %v870 = vadd.f32 %v868, %v869
        %v871 = vrot.slane %v870, 2
        %v872 = vadd.f32 %v870, %v871
        %v873 = vrot.slane %v872, 1
        %v874 = vadd.f32 %v872, %v873
        %v875 = vsel %vm501, %v438, 0.0
        %v876 = vrot.slane %v875, 4
        %v877 = vadd.f32 %v875, %v876
        %v878 = vrot.slane %v877, 2
        %v879 = vadd.f32 %v877, %v878
        %v880 = vrot.slane %v879, 1
        %v881 = vadd.f32 %v879, %v880
        %v882 = vsel %vm501, %v439, 0.0
        %v883 = vrot.slane %v882, 4
        %v884 = vadd.f32 %v882, %v883
        %v885 = vrot.slane %v884, 2
        %v886 = vadd.f32 %v884, %v885
        %v887 = vrot.slane %v886, 1
        %v888 = vadd.f32 %v886, %v887
        %v889 = vsel %vm501, %v440, 0.0
        %v890 = vrot.slane %v889, 4
        %v891 = vadd.f32 %v889, %v890
        %v892 = vrot.slane %v891, 2
        %v893 = vadd.f32 %v891, %v892
        %v894 = vrot.slane %v893, 1
        %v895 = vadd.f32 %v893, %v894
        %v896 = vsel %vm501, %v497, 0.0
        %v897 = vrot.slane %v896, 4
        %v898 = vadd.f32 %v896, %v897
        %v899 = vrot.slane %v898, 2
        %v900 = vadd.f32 %v898, %v899
        %v901 = vrot.slane %v900, 1
        %v902 = vadd.f32 %v900, %v901
        %v903 = vsel %vm501, %v498, 0.0
        %v904 = vrot.slane %v903, 4
        %v905 = vadd.f32 %v903, %v904
        %v906 = vrot.slane %v905, 2
        %v907 = vadd.f32 %v905, %v906
        %v908 = vrot.slane %v907, 1
        %v909 = vadd.f32 %v907, %v908
        %v910 = vsel %vm501, %v499, 0.0
        %v911 = vrot.slane %v910, 4
        %v912 = vadd.f32 %v910, %v911
        %v913 = vrot.slane %v912, 2
        %v914 = vadd.f32 %v912, %v913
        %v915 = vrot.slane %v914, 1
        %v916 = vadd.f32 %v914, %v915
        %v917 = vsel %vm501, %v500, 0.0
        %v918 = vrot.slane %v917, 4
        %v919 = vadd.f32 %v917, %v918
        %v920 = vrot.slane %v919, 2
        %v921 = vadd.f32 %v919, %v920
        %v922 = vrot.slane %v921, 1
        %v923 = vadd.f32 %v921, %v922
        %v924 = vmul.f32 %v437, %v497
        %v925 = vmul.f32 %v438, %v498
        %v926 = vmul.f32 %v439, %v499
        %v927 = vmul.f32 %v440, %v500
        %v928 = vsel %vm501, %v924, 0.0
        %v929 = vrot.slane %v928, 4
        %v930 = vadd.f32 %v928, %v929
        %v931 = vrot.slane %v930, 2
        %v932 = vadd.f32 %v930, %v931
        %v933 = vrot.slane %v932, 1
        %v934 = vadd.f32 %v932, %v933
        %v935 = vsel %vm501, %v925, 0.0
        %v936 = vrot.slane %v935, 4
        %v937 = vadd.f32 %v935, %v936
        %v938 = vrot.slane %v937, 2
        %v939 = vadd.f32 %v937, %v938
        %v940 = vrot.slane %v939, 1
        %v941 = vadd.f32 %v939, %v940
        %v942 = vsel %vm501, %v926, 0.0
        %v943 = vrot.slane %v942, 4
        %v944 = vadd.f32 %v942, %v943
        %v945 = vrot.slane %v944, 2
        %v946 = vadd.f32 %v944, %v945
        %v947 = vrot.slane %v946, 1
        %v948 = vadd.f32 %v946, %v947
        %v949 = vsel %vm501, %v927, 0.0
        %v950 = vrot.slane %v949, 4
        %v951 = vadd.f32 %v949, %v950
        %v952 = vrot.slane %v951, 2
        %v953 = vadd.f32 %v951, %v952
        %v954 = vrot.slane %v953, 1
        %v955 = vadd.f32 %v953, %v954
        %v956 = vmul.f32 %v437, %v437
        %v957 = vmul.f32 %v438, %v438
        %v958 = vmul.f32 %v439, %v439
        %v959 = vmul.f32 %v440, %v440
        %v960 = vsel %vm501, %v956, 0.0
        %v961 = vrot.slane %v960, 4
        %v962 = vadd.f32 %v960, %v961
        %v963 = vrot.slane %v962, 2
        %v964 = vadd.f32 %v962, %v963
        %v965 = vrot.slane %v964, 1
        %v966 = vadd.f32 %v964, %v965
        %v967 = vsel %vm501, %v957, 0.0
        %v968 = vrot.slane %v967, 4
        %v969 = vadd.f32 %v967, %v968
        %v970 = vrot.slane %v969, 2
        %v971 = vadd.f32 %v969, %v970
        %v972 = vrot.slane %v971, 1
        %v973 = vadd.f32 %v971, %v972
        %v974 = vsel %vm501, %v958, 0.0
        %v975 = vrot.slane %v974, 4
        %v976 = vadd.f32 %v974, %v975
        %v977 = vrot.slane %v976, 2
        %v978 = vadd.f32 %v976, %v977
        %v979 = vrot.slane %v978, 1
        %v980 = vadd.f32 %v978, %v979
        %v981 = vsel %vm501, %v959, 0.0
        %v982 = vrot.slane %v981, 4
        %v983 = vadd.f32 %v981, %v982
        %v984 = vrot.slane %v983, 2
        %v985 = vadd.f32 %v983, %v984
        %v986 = vrot.slane %v985, 1
        %v987 = vadd.f32 %v985, %v986
        %v988 = vmul.f32 %v497, %v497
        %v989 = vmul.f32 %v498, %v498
        %v990 = vmul.f32 %v499, %v499
        %v991 = vmul.f32 %v500, %v500
        %v992 = vsel %vm501, %v988, 0.0
        %v993 = vrot.slane %v992, 4
        %v994 = vadd.f32 %v992, %v993
        %v995 = vrot.slane %v994, 2
        %v996 = vadd.f32 %v994, %v995
        %v997 = vrot.slane %v996, 1
        %v998 = vadd.f32 %v996, %v997
        %v999 = vsel %vm501, %v989, 0.0
        %v1000 = vrot.slane %v999, 4
        %v1001 = vadd.f32 %v999, %v1000
        %v1002 = vrot.slane %v1001, 2
        %v1003 = vadd.f32 %v1001, %v1002
        %v1004 = vrot.slane %v1003, 1
        %v1005 = vadd.f32 %v1003, %v1004
        %v1006 = vsel %vm501, %v990, 0.0
        %v1007 = vrot.slane %v1006, 4
        %v1008 = vadd.f32 %v1006, %v1007
        %v1009 = vrot.slane %v1008, 2
        %v1010 = vadd.f32 %v1008, %v1009
        %v1011 = vrot.slane %v1010, 1
        %v1012 = vadd.f32 %v1010, %v1011
        %v1013 = vsel %vm501, %v991, 0.0
        %v1014 = vrot.slane %v1013, 4
        %v1015 = vadd.f32 %v1013, %v1014
        %v1016 = vrot.slane %v1015, 2
        %v1017 = vadd.f32 %v1015, %v1016
        %v1018 = vrot.slane %v1017, 1
        %v1019 = vadd.f32 %v1017, %v1018
        %v1020 = vsel %vm501, %v437, inf
        %v1021 = vrot.slane %v1020, 4
        %v1022 = vmin.f32 %v1020, %v1021
        %v1023 = vrot.slane %v1022, 2
        %v1024 = vmin.f32 %v1022, %v1023
        %v1025 = vrot.slane %v1024, 1
        %v1026 = vmin.f32 %v1024, %v1025
        %v1027 = vsel %vm501, %v438, inf
        %v1028 = vrot.slane %v1027, 4
        %v1029 = vmin.f32 %v1027, %v1028
        %v1030 = vrot.slane %v1029, 2
        %v1031 = vmin.f32 %v1029, %v1030
        %v1032 = vrot.slane %v1031, 1
        %v1033 = vmin.f32 %v1031, %v1032
        %v1034 = vsel %vm501, %v439, inf
        %v1035 = vrot.slane %v1034, 4
        %v1036 = vmin.f32 %v1034, %v1035
        %v1037 = vrot.slane %v1036, 2
        %v1038 = vmin.f32 %v1036, %v1037
        %v1039 = vrot.slane %v1038, 1
        %v1040 = vmin.f32 %v1038, %v1039
        %v1041 = vsel %vm501, %v440, inf
        %v1042 = vrot.slane %v1041, 4
        %v1043 = vmin.f32 %v1041, %v1042
        %v1044 = vrot.slane %v1043, 2
        %v1045 = vmin.f32 %v1043, %v1044
        %v1046 = vrot.slane %v1045, 1
        %v1047 = vmin.f32 %v1045, %v1046
        %v1048 = vsel %vm501, %v497, inf
        %v1049 = vrot.slane %v1048, 4
        %v1050 = vmin.f32 %v1048, %v1049
        %v1051 = vrot.slane %v1050, 2
        %v1052 = vmin.f32 %v1050, %v1051
        %v1053 = vrot.slane %v1052, 1
        %v1054 = vmin.f32 %v1052, %v1053
        %v1055 = vsel %vm501, %v498, inf
        %v1056 = vrot.slane %v1055, 4
        %v1057 = vmin.f32 %v1055, %v1056
        %v1058 = vrot.slane %v1057, 2
        %v1059 = vmin.f32 %v1057, %v1058
        %v1060 = vrot.slane %v1059, 1
        %v1061 = vmin.f32 %v1059, %v1060
        %v1062 = vsel %vm501, %v499, inf
        %v1063 = vrot.slane %v1062, 4
        %v1064 = vmin.f32 %v1062, %v1063
        %v1065 = vrot.slane %v1064, 2
        %v1066 = vmin.f32 %v1064, %v1065
        %v1067 = vrot.slane %v1066, 1
        %v1068 = vmin.f32 %v1066, %v1067
        %v1069 = vsel %vm501, %v500, inf
        %v1070 = vrot.slane %v1069, 4
        %v1071 = vmin.f32 %v1069, %v1070
        %v1072 = vrot.slane %v1071, 2
        %v1073 = vmin.f32 %v1071, %v1072
        %v1074 = vrot.slane %v1073, 1
        %v1075 = vmin.f32 %v1073, %v1074
        %v1080 = vsel %vm714, %v881, %v874
        %v1081 = vsel %vm716, %v888, %v1080
        %v1082 = vsel %vm718, %v895, %v1081
        %v1084 = vsel %vm721, %v1082, 0.0
        %1085 = vadd.xlane.f32.xlu0 %v1084
        %v1086 = vpop.xlane.xlu0 %1085
        %v1091 = vsel %vm714, %v909, %v902
        %v1092 = vsel %vm716, %v916, %v1091
        %v1093 = vsel %vm718, %v923, %v1092
        %v1095 = vsel %vm721, %v1093, 0.0
        %1096 = vadd.xlane.f32.xlu0 %v1095
        %v1097 = vpop.xlane.xlu0 %1096
        %v1102 = vsel %vm714, %v941, %v934
        %v1103 = vsel %vm716, %v948, %v1102
        %v1104 = vsel %vm718, %v955, %v1103
        %v1106 = vsel %vm721, %v1104, 0.0
        %1107 = vadd.xlane.f32.xlu0 %v1106
        %v1108 = vpop.xlane.xlu0 %1107
        %v1113 = vsel %vm714, %v973, %v966
        %v1114 = vsel %vm716, %v980, %v1113
        %v1115 = vsel %vm718, %v987, %v1114
        %v1117 = vsel %vm721, %v1115, 0.0
        %1118 = vadd.xlane.f32.xlu0 %v1117
        %v1119 = vpop.xlane.xlu0 %1118
        %v1124 = vsel %vm714, %v1005, %v998
        %v1125 = vsel %vm716, %v1012, %v1124
        %v1126 = vsel %vm718, %v1019, %v1125
        %v1128 = vsel %vm721, %v1126, 0.0
        %1129 = vadd.xlane.f32.xlu0 %v1128
        %v1130 = vpop.xlane.xlu0 %1129
        %v1135 = vsel %vm714, %v1033, %v1026
        %v1136 = vsel %vm716, %v1040, %v1135
        %v1137 = vsel %vm718, %v1047, %v1136
        %v1139 = vsel %vm721, %v1137, inf
        %1140 = vmin.xlane.f32.xlu0 %v1139
        %v1141 = vpop.xlane.xlu0 %1140
        %v1146 = vsel %vm714, %v1061, %v1054
        %v1147 = vsel %vm716, %v1068, %v1146
        %v1148 = vsel %vm718, %v1075, %v1147
        %v1150 = vsel %vm721, %v1148, inf
        %1151 = vmin.xlane.f32.xlu0 %v1150
        %v1152 = vpop.xlane.xlu0 %1151
        %v1153 = vmul.f32 %v1152, %v1086
        %v1154 = vsub.f32 %v1108, %v1153
        %v1155 = vmul.f32 %v1141, %v1097
        %v1156 = vsub.f32 %v1154, %v1155
        %v1157 = vmul.f32 %v1141, 64.0
        %v1158 = vmul.f32 %v1157, %v1152
        %v1159 = vadd.f32 %v1156, %v1158
        %v1160 = vmul.f32 %v1141, 2.0
        %v1161 = vmul.f32 %v1160, %v1086
        %v1162 = vsub.f32 %v1119, %v1161
        %v1163 = vmul.f32 %v1157, %v1141
        %v1164 = vadd.f32 %v1162, %v1163
        %v1165 = vmul.f32 %v1152, 2.0
        %v1166 = vmul.f32 %v1165, %v1097
        %v1167 = vsub.f32 %v1130, %v1166
        %v1168 = vmul.f32 %v1152, 64.0
        %v1169 = vmul.f32 %v1168, %v1152
        %v1170 = vadd.f32 %v1167, %v1169
        %1171 = vrot.lane.b32.xlu0 %v1082, 120
        %v1172 = vpop.permute.xlu0 %1171
        %v1174 = vsel %vm721, %v1172, 0.0
        %1175 = vadd.xlane.f32.xlu0 %v1174
        %v1176 = vpop.xlane.xlu0 %1175
        %1177 = vrot.lane.b32.xlu0 %v1093, 120
        %v1178 = vpop.permute.xlu0 %1177
        %v1180 = vsel %vm721, %v1178, 0.0
        %1181 = vadd.xlane.f32.xlu0 %v1180
        %v1182 = vpop.xlane.xlu0 %1181
        %1183 = vrot.lane.b32.xlu0 %v1104, 120
        %v1184 = vpop.permute.xlu0 %1183
        %v1186 = vsel %vm721, %v1184, 0.0
        %1187 = vadd.xlane.f32.xlu0 %v1186
        %v1188 = vpop.xlane.xlu0 %1187
        %1189 = vrot.lane.b32.xlu0 %v1115, 120
        %v1190 = vpop.permute.xlu0 %1189
        %v1192 = vsel %vm721, %v1190, 0.0
        %1193 = vadd.xlane.f32.xlu0 %v1192
        %v1194 = vpop.xlane.xlu0 %1193
        %1195 = vrot.lane.b32.xlu0 %v1126, 120
        %v1196 = vpop.permute.xlu0 %1195
        %v1198 = vsel %vm721, %v1196, 0.0
        %1199 = vadd.xlane.f32.xlu0 %v1198
        %v1200 = vpop.xlane.xlu0 %1199
        %v1201 = vsel %vm839, %v1137, inf
        %1202 = vmin.xlane.f32.xlu0 %v1201
        %v1203 = vpop.xlane.xlu0 %1202
        %v1204 = vsel %vm839, %v1148, inf
        %1205 = vmin.xlane.f32.xlu0 %v1204
        %v1206 = vpop.xlane.xlu0 %1205
        %v1207 = vmul.f32 %v1206, %v1176
        %v1208 = vsub.f32 %v1188, %v1207
        %v1209 = vmul.f32 %v1203, %v1182
        %v1210 = vsub.f32 %v1208, %v1209
        %v1211 = vmul.f32 %v1203, 64.0
        %v1212 = vmul.f32 %v1211, %v1206
        %v1213 = vadd.f32 %v1210, %v1212
        %v1214 = vmul.f32 %v1203, 2.0
        %v1215 = vmul.f32 %v1214, %v1176
        %v1216 = vsub.f32 %v1194, %v1215
        %v1217 = vmul.f32 %v1211, %v1203
        %v1218 = vadd.f32 %v1216, %v1217
        %v1219 = vmul.f32 %v1206, 2.0
        %v1220 = vmul.f32 %v1219, %v1182
        %v1221 = vsub.f32 %v1200, %v1220
        %v1222 = vmul.f32 %v1206, 64.0
        %v1223 = vmul.f32 %v1222, %v1206
        %v1224 = vadd.f32 %v1221, %v1223
        %v1225 = vsel %vm864, %v1159, %v1213
        %v1226 = vsel %vm864, %v1164, %v1218
        %v1227 = vsel %vm864, %v1170, %v1224
        %v1228 = vld [vmem:[%s266 + $0x8] sm:$0xff]
        %v1229 = vld [vmem:[%s266 + $0x18] sm:$0xff]
        %v1230 = vld [vmem:[%s266 + $0x28] sm:$0xff]
        %v1231 = vld [vmem:[%s266 + $0x38] sm:$0xff]
        %v1232 = vld [vmem:[%s275 + $0x8] sm:$0xff]
        %v1233 = vld [vmem:[%s275 + $0x18] sm:$0xff]
        %v1234 = vld [vmem:[%s275 + $0x28] sm:$0xff]
        %v1235 = vld [vmem:[%s275 + $0x38] sm:$0xff]
        %1240 = vrot.lane.b32.xlu0 %v1228, 127
        %v1241 = vpop.permute.xlu0 %1240
        %1242 = vrot.lane.b32.xlu0 %v1229, 127
        %v1243 = vpop.permute.xlu0 %1242
        %1244 = vrot.lane.b32.xlu0 %v1230, 127
        %v1245 = vpop.permute.xlu0 %1244
        %1246 = vrot.lane.b32.xlu0 %v1231, 127
        %v1247 = vpop.permute.xlu0 %1246
        %v1252 = vsel %vm395, %v1241, 0.0
        %v1253 = vsel %vm395, %v1243, 0.0
        %v1254 = vsel %vm395, %v1245, 0.0
        %v1255 = vsel %vm395, %v1247, 0.0
        %v1256 = vrot.slane %v1228, 1
        %v1257 = vrot.slane %v1229, 1
        %v1258 = vrot.slane %v1230, 1
        %v1259 = vrot.slane %v1231, 1
        %v1268 = vlaneseq
        %v1269 = vshrl.u32 %v1268, 7
        %v1270 = vsub.s32 0, %v1269
        %v1271 = vrot.slane %v355, %v1270
        %v1272 = vlaneseq
        %v1273 = vshrl.u32 %v1272, 7
        %v1274 = vsub.s32 0, %v1273
        %v1275 = vrot.slane %v356, %v1274
        %v1276 = vlaneseq
        %v1277 = vshrl.u32 %v1276, 7
        %v1278 = vsub.s32 0, %v1277
        %v1279 = vrot.slane %v357, %v1278
        %v1280 = vlaneseq
        %v1281 = vshrl.u32 %v1280, 7
        %v1282 = vsub.s32 0, %v1281
        %v1283 = vrot.slane %v358, %v1282
        %v1288 = vsel %vm420, %v1256, %v1271
        %v1289 = vsel %vm420, %v1257, %v1275
        %v1290 = vsel %vm420, %v1258, %v1279
        %v1291 = vsel %vm420, %v1259, %v1283
        %v1292 = vsub.f32 %v1228, %v1252
        %v1293 = vsub.f32 %v1229, %v1253
        %v1294 = vsub.f32 %v1230, %v1254
        %v1295 = vsub.f32 %v1231, %v1255
        %v1296 = vand.u32 2147483647, %v1292
        %v1297 = vand.u32 2147483647, %v1293
        %v1298 = vand.u32 2147483647, %v1294
        %v1299 = vand.u32 2147483647, %v1295
        %v1300 = vsub.f32 %v1228, %v1288
        %v1301 = vsub.f32 %v1229, %v1289
        %v1302 = vsub.f32 %v1230, %v1290
        %v1303 = vsub.f32 %v1231, %v1291
        %v1304 = vand.u32 2147483647, %v1300
        %v1305 = vand.u32 2147483647, %v1301
        %v1306 = vand.u32 2147483647, %v1302
        %v1307 = vand.u32 2147483647, %v1303
        %1312 = vrot.lane.b32.xlu0 %v1232, 127
        %v1313 = vpop.permute.xlu0 %1312
        %1314 = vrot.lane.b32.xlu0 %v1233, 127
        %v1315 = vpop.permute.xlu0 %1314
        %1316 = vrot.lane.b32.xlu0 %v1234, 127
        %v1317 = vpop.permute.xlu0 %1316
        %1318 = vrot.lane.b32.xlu0 %v1235, 127
        %v1319 = vpop.permute.xlu0 %1318
        %v1324 = vsel %vm395, %v1313, 0.0
        %v1325 = vsel %vm395, %v1315, 0.0
        %v1326 = vsel %vm395, %v1317, 0.0
        %v1327 = vsel %vm395, %v1319, 0.0
        %v1328 = vrot.slane %v1232, 1
        %v1329 = vrot.slane %v1233, 1
        %v1330 = vrot.slane %v1234, 1
        %v1331 = vrot.slane %v1235, 1
        %v1340 = vlaneseq
        %v1341 = vshrl.u32 %v1340, 7
        %v1342 = vsub.s32 0, %v1341
        %v1343 = vrot.slane %v359, %v1342
        %v1344 = vlaneseq
        %v1345 = vshrl.u32 %v1344, 7
        %v1346 = vsub.s32 0, %v1345
        %v1347 = vrot.slane %v360, %v1346
        %v1348 = vlaneseq
        %v1349 = vshrl.u32 %v1348, 7
        %v1350 = vsub.s32 0, %v1349
        %v1351 = vrot.slane %v361, %v1350
        %v1352 = vlaneseq
        %v1353 = vshrl.u32 %v1352, 7
        %v1354 = vsub.s32 0, %v1353
        %v1355 = vrot.slane %v362, %v1354
        %v1360 = vsel %vm420, %v1328, %v1343
        %v1361 = vsel %vm420, %v1329, %v1347
        %v1362 = vsel %vm420, %v1330, %v1351
        %v1363 = vsel %vm420, %v1331, %v1355
        %v1364 = vsub.f32 %v1232, %v1324
        %v1365 = vsub.f32 %v1233, %v1325
        %v1366 = vsub.f32 %v1234, %v1326
        %v1367 = vsub.f32 %v1235, %v1327
        %v1368 = vand.u32 2147483647, %v1364
        %v1369 = vand.u32 2147483647, %v1365
        %v1370 = vand.u32 2147483647, %v1366
        %v1371 = vand.u32 2147483647, %v1367
        %v1372 = vsub.f32 %v1232, %v1360
        %v1373 = vsub.f32 %v1233, %v1361
        %v1374 = vsub.f32 %v1234, %v1362
        %v1375 = vsub.f32 %v1235, %v1363
        %v1376 = vand.u32 2147483647, %v1372
        %v1377 = vand.u32 2147483647, %v1373
        %v1378 = vand.u32 2147483647, %v1374
        %v1379 = vand.u32 2147483647, %v1375
        %v1380 = vsel %vm501, %v1296, 0.0
        %v1381 = vrot.slane %v1380, 4
        %v1382 = vadd.f32 %v1380, %v1381
        %v1383 = vrot.slane %v1382, 2
        %v1384 = vadd.f32 %v1382, %v1383
        %v1385 = vrot.slane %v1384, 1
        %v1386 = vadd.f32 %v1384, %v1385
        %v1387 = vsel %vm501, %v1297, 0.0
        %v1388 = vrot.slane %v1387, 4
        %v1389 = vadd.f32 %v1387, %v1388
        %v1390 = vrot.slane %v1389, 2
        %v1391 = vadd.f32 %v1389, %v1390
        %v1392 = vrot.slane %v1391, 1
        %v1393 = vadd.f32 %v1391, %v1392
        %v1394 = vsel %vm501, %v1298, 0.0
        %v1395 = vrot.slane %v1394, 4
        %v1396 = vadd.f32 %v1394, %v1395
        %v1397 = vrot.slane %v1396, 2
        %v1398 = vadd.f32 %v1396, %v1397
        %v1399 = vrot.slane %v1398, 1
        %v1400 = vadd.f32 %v1398, %v1399
        %v1401 = vsel %vm501, %v1299, 0.0
        %v1402 = vrot.slane %v1401, 4
        %v1403 = vadd.f32 %v1401, %v1402
        %v1404 = vrot.slane %v1403, 2
        %v1405 = vadd.f32 %v1403, %v1404
        %v1406 = vrot.slane %v1405, 1
        %v1407 = vadd.f32 %v1405, %v1406
        %v1408 = vsel %vm501, %v1368, 0.0
        %v1409 = vrot.slane %v1408, 4
        %v1410 = vadd.f32 %v1408, %v1409
        %v1411 = vrot.slane %v1410, 2
        %v1412 = vadd.f32 %v1410, %v1411
        %v1413 = vrot.slane %v1412, 1
        %v1414 = vadd.f32 %v1412, %v1413
        %v1415 = vsel %vm501, %v1369, 0.0
        %v1416 = vrot.slane %v1415, 4
        %v1417 = vadd.f32 %v1415, %v1416
        %v1418 = vrot.slane %v1417, 2
        %v1419 = vadd.f32 %v1417, %v1418
        %v1420 = vrot.slane %v1419, 1
        %v1421 = vadd.f32 %v1419, %v1420
        %v1422 = vsel %vm501, %v1370, 0.0
        %v1423 = vrot.slane %v1422, 4
        %v1424 = vadd.f32 %v1422, %v1423
        %v1425 = vrot.slane %v1424, 2
        %v1426 = vadd.f32 %v1424, %v1425
        %v1427 = vrot.slane %v1426, 1
        %v1428 = vadd.f32 %v1426, %v1427
        %v1429 = vsel %vm501, %v1371, 0.0
        %v1430 = vrot.slane %v1429, 4
        %v1431 = vadd.f32 %v1429, %v1430
        %v1432 = vrot.slane %v1431, 2
        %v1433 = vadd.f32 %v1431, %v1432
        %v1434 = vrot.slane %v1433, 1
        %v1435 = vadd.f32 %v1433, %v1434
        %v1436 = vmul.f32 %v1296, %v1368
        %v1437 = vmul.f32 %v1297, %v1369
        %v1438 = vmul.f32 %v1298, %v1370
        %v1439 = vmul.f32 %v1299, %v1371
        %v1440 = vsel %vm501, %v1436, 0.0
        %v1441 = vrot.slane %v1440, 4
        %v1442 = vadd.f32 %v1440, %v1441
        %v1443 = vrot.slane %v1442, 2
        %v1444 = vadd.f32 %v1442, %v1443
        %v1445 = vrot.slane %v1444, 1
        %v1446 = vadd.f32 %v1444, %v1445
        %v1447 = vsel %vm501, %v1437, 0.0
        %v1448 = vrot.slane %v1447, 4
        %v1449 = vadd.f32 %v1447, %v1448
        %v1450 = vrot.slane %v1449, 2
        %v1451 = vadd.f32 %v1449, %v1450
        %v1452 = vrot.slane %v1451, 1
        %v1453 = vadd.f32 %v1451, %v1452
        %v1454 = vsel %vm501, %v1438, 0.0
        %v1455 = vrot.slane %v1454, 4
        %v1456 = vadd.f32 %v1454, %v1455
        %v1457 = vrot.slane %v1456, 2
        %v1458 = vadd.f32 %v1456, %v1457
        %v1459 = vrot.slane %v1458, 1
        %v1460 = vadd.f32 %v1458, %v1459
        %v1461 = vsel %vm501, %v1439, 0.0
        %v1462 = vrot.slane %v1461, 4
        %v1463 = vadd.f32 %v1461, %v1462
        %v1464 = vrot.slane %v1463, 2
        %v1465 = vadd.f32 %v1463, %v1464
        %v1466 = vrot.slane %v1465, 1
        %v1467 = vadd.f32 %v1465, %v1466
        %v1468 = vmul.f32 %v1296, %v1296
        %v1469 = vmul.f32 %v1297, %v1297
        %v1470 = vmul.f32 %v1298, %v1298
        %v1471 = vmul.f32 %v1299, %v1299
        %v1472 = vsel %vm501, %v1468, 0.0
        %v1473 = vrot.slane %v1472, 4
        %v1474 = vadd.f32 %v1472, %v1473
        %v1475 = vrot.slane %v1474, 2
        %v1476 = vadd.f32 %v1474, %v1475
        %v1477 = vrot.slane %v1476, 1
        %v1478 = vadd.f32 %v1476, %v1477
        %v1479 = vsel %vm501, %v1469, 0.0
        %v1480 = vrot.slane %v1479, 4
        %v1481 = vadd.f32 %v1479, %v1480
        %v1482 = vrot.slane %v1481, 2
        %v1483 = vadd.f32 %v1481, %v1482
        %v1484 = vrot.slane %v1483, 1
        %v1485 = vadd.f32 %v1483, %v1484
        %v1486 = vsel %vm501, %v1470, 0.0
        %v1487 = vrot.slane %v1486, 4
        %v1488 = vadd.f32 %v1486, %v1487
        %v1489 = vrot.slane %v1488, 2
        %v1490 = vadd.f32 %v1488, %v1489
        %v1491 = vrot.slane %v1490, 1
        %v1492 = vadd.f32 %v1490, %v1491
        %v1493 = vsel %vm501, %v1471, 0.0
        %v1494 = vrot.slane %v1493, 4
        %v1495 = vadd.f32 %v1493, %v1494
        %v1496 = vrot.slane %v1495, 2
        %v1497 = vadd.f32 %v1495, %v1496
        %v1498 = vrot.slane %v1497, 1
        %v1499 = vadd.f32 %v1497, %v1498
        %v1500 = vmul.f32 %v1368, %v1368
        %v1501 = vmul.f32 %v1369, %v1369
        %v1502 = vmul.f32 %v1370, %v1370
        %v1503 = vmul.f32 %v1371, %v1371
        %v1504 = vsel %vm501, %v1500, 0.0
        %v1505 = vrot.slane %v1504, 4
        %v1506 = vadd.f32 %v1504, %v1505
        %v1507 = vrot.slane %v1506, 2
        %v1508 = vadd.f32 %v1506, %v1507
        %v1509 = vrot.slane %v1508, 1
        %v1510 = vadd.f32 %v1508, %v1509
        %v1511 = vsel %vm501, %v1501, 0.0
        %v1512 = vrot.slane %v1511, 4
        %v1513 = vadd.f32 %v1511, %v1512
        %v1514 = vrot.slane %v1513, 2
        %v1515 = vadd.f32 %v1513, %v1514
        %v1516 = vrot.slane %v1515, 1
        %v1517 = vadd.f32 %v1515, %v1516
        %v1518 = vsel %vm501, %v1502, 0.0
        %v1519 = vrot.slane %v1518, 4
        %v1520 = vadd.f32 %v1518, %v1519
        %v1521 = vrot.slane %v1520, 2
        %v1522 = vadd.f32 %v1520, %v1521
        %v1523 = vrot.slane %v1522, 1
        %v1524 = vadd.f32 %v1522, %v1523
        %v1525 = vsel %vm501, %v1503, 0.0
        %v1526 = vrot.slane %v1525, 4
        %v1527 = vadd.f32 %v1525, %v1526
        %v1528 = vrot.slane %v1527, 2
        %v1529 = vadd.f32 %v1527, %v1528
        %v1530 = vrot.slane %v1529, 1
        %v1531 = vadd.f32 %v1529, %v1530
        %v1532 = vsel %vm501, %v1296, inf
        %v1533 = vrot.slane %v1532, 4
        %v1534 = vmin.f32 %v1532, %v1533
        %v1535 = vrot.slane %v1534, 2
        %v1536 = vmin.f32 %v1534, %v1535
        %v1537 = vrot.slane %v1536, 1
        %v1538 = vmin.f32 %v1536, %v1537
        %v1539 = vsel %vm501, %v1297, inf
        %v1540 = vrot.slane %v1539, 4
        %v1541 = vmin.f32 %v1539, %v1540
        %v1542 = vrot.slane %v1541, 2
        %v1543 = vmin.f32 %v1541, %v1542
        %v1544 = vrot.slane %v1543, 1
        %v1545 = vmin.f32 %v1543, %v1544
        %v1546 = vsel %vm501, %v1298, inf
        %v1547 = vrot.slane %v1546, 4
        %v1548 = vmin.f32 %v1546, %v1547
        %v1549 = vrot.slane %v1548, 2
        %v1550 = vmin.f32 %v1548, %v1549
        %v1551 = vrot.slane %v1550, 1
        %v1552 = vmin.f32 %v1550, %v1551
        %v1553 = vsel %vm501, %v1299, inf
        %v1554 = vrot.slane %v1553, 4
        %v1555 = vmin.f32 %v1553, %v1554
        %v1556 = vrot.slane %v1555, 2
        %v1557 = vmin.f32 %v1555, %v1556
        %v1558 = vrot.slane %v1557, 1
        %v1559 = vmin.f32 %v1557, %v1558
        %v1560 = vsel %vm501, %v1368, inf
        %v1561 = vrot.slane %v1560, 4
        %v1562 = vmin.f32 %v1560, %v1561
        %v1563 = vrot.slane %v1562, 2
        %v1564 = vmin.f32 %v1562, %v1563
        %v1565 = vrot.slane %v1564, 1
        %v1566 = vmin.f32 %v1564, %v1565
        %v1567 = vsel %vm501, %v1369, inf
        %v1568 = vrot.slane %v1567, 4
        %v1569 = vmin.f32 %v1567, %v1568
        %v1570 = vrot.slane %v1569, 2
        %v1571 = vmin.f32 %v1569, %v1570
        %v1572 = vrot.slane %v1571, 1
        %v1573 = vmin.f32 %v1571, %v1572
        %v1574 = vsel %vm501, %v1370, inf
        %v1575 = vrot.slane %v1574, 4
        %v1576 = vmin.f32 %v1574, %v1575
        %v1577 = vrot.slane %v1576, 2
        %v1578 = vmin.f32 %v1576, %v1577
        %v1579 = vrot.slane %v1578, 1
        %v1580 = vmin.f32 %v1578, %v1579
        %v1581 = vsel %vm501, %v1371, inf
        %v1582 = vrot.slane %v1581, 4
        %v1583 = vmin.f32 %v1581, %v1582
        %v1584 = vrot.slane %v1583, 2
        %v1585 = vmin.f32 %v1583, %v1584
        %v1586 = vrot.slane %v1585, 1
        %v1587 = vmin.f32 %v1585, %v1586
        %v1592 = vsel %vm714, %v1393, %v1386
        %v1593 = vsel %vm716, %v1400, %v1592
        %v1594 = vsel %vm718, %v1407, %v1593
        %v1596 = vsel %vm721, %v1594, 0.0
        %1597 = vadd.xlane.f32.xlu0 %v1596
        %v1598 = vpop.xlane.xlu0 %1597
        %v1603 = vsel %vm714, %v1421, %v1414
        %v1604 = vsel %vm716, %v1428, %v1603
        %v1605 = vsel %vm718, %v1435, %v1604
        %v1607 = vsel %vm721, %v1605, 0.0
        %1608 = vadd.xlane.f32.xlu0 %v1607
        %v1609 = vpop.xlane.xlu0 %1608
        %v1614 = vsel %vm714, %v1453, %v1446
        %v1615 = vsel %vm716, %v1460, %v1614
        %v1616 = vsel %vm718, %v1467, %v1615
        %v1618 = vsel %vm721, %v1616, 0.0
        %1619 = vadd.xlane.f32.xlu0 %v1618
        %v1620 = vpop.xlane.xlu0 %1619
        %v1625 = vsel %vm714, %v1485, %v1478
        %v1626 = vsel %vm716, %v1492, %v1625
        %v1627 = vsel %vm718, %v1499, %v1626
        %v1629 = vsel %vm721, %v1627, 0.0
        %1630 = vadd.xlane.f32.xlu0 %v1629
        %v1631 = vpop.xlane.xlu0 %1630
        %v1636 = vsel %vm714, %v1517, %v1510
        %v1637 = vsel %vm716, %v1524, %v1636
        %v1638 = vsel %vm718, %v1531, %v1637
        %v1640 = vsel %vm721, %v1638, 0.0
        %1641 = vadd.xlane.f32.xlu0 %v1640
        %v1642 = vpop.xlane.xlu0 %1641
        %v1647 = vsel %vm714, %v1545, %v1538
        %v1648 = vsel %vm716, %v1552, %v1647
        %v1649 = vsel %vm718, %v1559, %v1648
        %v1651 = vsel %vm721, %v1649, inf
        %1652 = vmin.xlane.f32.xlu0 %v1651
        %v1653 = vpop.xlane.xlu0 %1652
        %v1658 = vsel %vm714, %v1573, %v1566
        %v1659 = vsel %vm716, %v1580, %v1658
        %v1660 = vsel %vm718, %v1587, %v1659
        %v1662 = vsel %vm721, %v1660, inf
        %1663 = vmin.xlane.f32.xlu0 %v1662
        %v1664 = vpop.xlane.xlu0 %1663
        %v1665 = vmul.f32 %v1664, %v1598
        %v1666 = vsub.f32 %v1620, %v1665
        %v1667 = vmul.f32 %v1653, %v1609
        %v1668 = vsub.f32 %v1666, %v1667
        %v1669 = vmul.f32 %v1653, 64.0
        %v1670 = vmul.f32 %v1669, %v1664
        %v1671 = vadd.f32 %v1668, %v1670
        %v1672 = vmul.f32 %v1653, 2.0
        %v1673 = vmul.f32 %v1672, %v1598
        %v1674 = vsub.f32 %v1631, %v1673
        %v1675 = vmul.f32 %v1669, %v1653
        %v1676 = vadd.f32 %v1674, %v1675
        %v1677 = vmul.f32 %v1664, 2.0
        %v1678 = vmul.f32 %v1677, %v1609
        %v1679 = vsub.f32 %v1642, %v1678
        %v1680 = vmul.f32 %v1664, 64.0
        %v1681 = vmul.f32 %v1680, %v1664
        %v1682 = vadd.f32 %v1679, %v1681
        %1683 = vrot.lane.b32.xlu0 %v1594, 120
        %v1684 = vpop.permute.xlu0 %1683
        %v1686 = vsel %vm721, %v1684, 0.0
        %1687 = vadd.xlane.f32.xlu0 %v1686
        %v1688 = vpop.xlane.xlu0 %1687
        %1689 = vrot.lane.b32.xlu0 %v1605, 120
        %v1690 = vpop.permute.xlu0 %1689
        %v1692 = vsel %vm721, %v1690, 0.0
        %1693 = vadd.xlane.f32.xlu0 %v1692
        %v1694 = vpop.xlane.xlu0 %1693
        %1695 = vrot.lane.b32.xlu0 %v1616, 120
        %v1696 = vpop.permute.xlu0 %1695
        %v1698 = vsel %vm721, %v1696, 0.0
        %1699 = vadd.xlane.f32.xlu0 %v1698
        %v1700 = vpop.xlane.xlu0 %1699
        %1701 = vrot.lane.b32.xlu0 %v1627, 120
        %v1702 = vpop.permute.xlu0 %1701
        %v1704 = vsel %vm721, %v1702, 0.0
        %1705 = vadd.xlane.f32.xlu0 %v1704
        %v1706 = vpop.xlane.xlu0 %1705
        %1707 = vrot.lane.b32.xlu0 %v1638, 120
        %v1708 = vpop.permute.xlu0 %1707
        %v1710 = vsel %vm721, %v1708, 0.0
        %1711 = vadd.xlane.f32.xlu0 %v1710
        %v1712 = vpop.xlane.xlu0 %1711
        %v1713 = vsel %vm839, %v1649, inf
        %1714 = vmin.xlane.f32.xlu0 %v1713
        %v1715 = vpop.xlane.xlu0 %1714
        %v1716 = vsel %vm839, %v1660, inf
        %1717 = vmin.xlane.f32.xlu0 %v1716
        %v1718 = vpop.xlane.xlu0 %1717
        %v1719 = vmul.f32 %v1718, %v1688
        %v1720 = vsub.f32 %v1700, %v1719
        %v1721 = vmul.f32 %v1715, %v1694
        %v1722 = vsub.f32 %v1720, %v1721
        %v1723 = vmul.f32 %v1715, 64.0
        %v1724 = vmul.f32 %v1723, %v1718
        %v1725 = vadd.f32 %v1722, %v1724
        %v1726 = vmul.f32 %v1715, 2.0
        %v1727 = vmul.f32 %v1726, %v1688
        %v1728 = vsub.f32 %v1706, %v1727
        %v1729 = vmul.f32 %v1723, %v1715
        %v1730 = vadd.f32 %v1728, %v1729
        %v1731 = vmul.f32 %v1718, 2.0
        %v1732 = vmul.f32 %v1731, %v1694
        %v1733 = vsub.f32 %v1712, %v1732
        %v1734 = vmul.f32 %v1718, 64.0
        %v1735 = vmul.f32 %v1734, %v1718
        %v1736 = vadd.f32 %v1733, %v1735
        %v1737 = vsel %vm864, %v1671, %v1725
        %v1738 = vsel %vm864, %v1676, %v1730
        %v1739 = vsel %vm864, %v1682, %v1736
        %v1740 = vsel %vm501, %v1304, 0.0
        %v1741 = vrot.slane %v1740, 4
        %v1742 = vadd.f32 %v1740, %v1741
        %v1743 = vrot.slane %v1742, 2
        %v1744 = vadd.f32 %v1742, %v1743
        %v1745 = vrot.slane %v1744, 1
        %v1746 = vadd.f32 %v1744, %v1745
        %v1747 = vsel %vm501, %v1305, 0.0
        %v1748 = vrot.slane %v1747, 4
        %v1749 = vadd.f32 %v1747, %v1748
        %v1750 = vrot.slane %v1749, 2
        %v1751 = vadd.f32 %v1749, %v1750
        %v1752 = vrot.slane %v1751, 1
        %v1753 = vadd.f32 %v1751, %v1752
        %v1754 = vsel %vm501, %v1306, 0.0
        %v1755 = vrot.slane %v1754, 4
        %v1756 = vadd.f32 %v1754, %v1755
        %v1757 = vrot.slane %v1756, 2
        %v1758 = vadd.f32 %v1756, %v1757
        %v1759 = vrot.slane %v1758, 1
        %v1760 = vadd.f32 %v1758, %v1759
        %v1761 = vsel %vm501, %v1307, 0.0
        %v1762 = vrot.slane %v1761, 4
        %v1763 = vadd.f32 %v1761, %v1762
        %v1764 = vrot.slane %v1763, 2
        %v1765 = vadd.f32 %v1763, %v1764
        %v1766 = vrot.slane %v1765, 1
        %v1767 = vadd.f32 %v1765, %v1766
        %v1768 = vsel %vm501, %v1376, 0.0
        %v1769 = vrot.slane %v1768, 4
        %v1770 = vadd.f32 %v1768, %v1769
        %v1771 = vrot.slane %v1770, 2
        %v1772 = vadd.f32 %v1770, %v1771
        %v1773 = vrot.slane %v1772, 1
        %v1774 = vadd.f32 %v1772, %v1773
        %v1775 = vsel %vm501, %v1377, 0.0
        %v1776 = vrot.slane %v1775, 4
        %v1777 = vadd.f32 %v1775, %v1776
        %v1778 = vrot.slane %v1777, 2
        %v1779 = vadd.f32 %v1777, %v1778
        %v1780 = vrot.slane %v1779, 1
        %v1781 = vadd.f32 %v1779, %v1780
        %v1782 = vsel %vm501, %v1378, 0.0
        %v1783 = vrot.slane %v1782, 4
        %v1784 = vadd.f32 %v1782, %v1783
        %v1785 = vrot.slane %v1784, 2
        %v1786 = vadd.f32 %v1784, %v1785
        %v1787 = vrot.slane %v1786, 1
        %v1788 = vadd.f32 %v1786, %v1787
        %v1789 = vsel %vm501, %v1379, 0.0
        %v1790 = vrot.slane %v1789, 4
        %v1791 = vadd.f32 %v1789, %v1790
        %v1792 = vrot.slane %v1791, 2
        %v1793 = vadd.f32 %v1791, %v1792
        %v1794 = vrot.slane %v1793, 1
        %v1795 = vadd.f32 %v1793, %v1794
        %v1796 = vmul.f32 %v1304, %v1376
        %v1797 = vmul.f32 %v1305, %v1377
        %v1798 = vmul.f32 %v1306, %v1378
        %v1799 = vmul.f32 %v1307, %v1379
        %v1800 = vsel %vm501, %v1796, 0.0
        %v1801 = vrot.slane %v1800, 4
        %v1802 = vadd.f32 %v1800, %v1801
        %v1803 = vrot.slane %v1802, 2
        %v1804 = vadd.f32 %v1802, %v1803
        %v1805 = vrot.slane %v1804, 1
        %v1806 = vadd.f32 %v1804, %v1805
        %v1807 = vsel %vm501, %v1797, 0.0
        %v1808 = vrot.slane %v1807, 4
        %v1809 = vadd.f32 %v1807, %v1808
        %v1810 = vrot.slane %v1809, 2
        %v1811 = vadd.f32 %v1809, %v1810
        %v1812 = vrot.slane %v1811, 1
        %v1813 = vadd.f32 %v1811, %v1812
        %v1814 = vsel %vm501, %v1798, 0.0
        %v1815 = vrot.slane %v1814, 4
        %v1816 = vadd.f32 %v1814, %v1815
        %v1817 = vrot.slane %v1816, 2
        %v1818 = vadd.f32 %v1816, %v1817
        %v1819 = vrot.slane %v1818, 1
        %v1820 = vadd.f32 %v1818, %v1819
        %v1821 = vsel %vm501, %v1799, 0.0
        %v1822 = vrot.slane %v1821, 4
        %v1823 = vadd.f32 %v1821, %v1822
        %v1824 = vrot.slane %v1823, 2
        %v1825 = vadd.f32 %v1823, %v1824
        %v1826 = vrot.slane %v1825, 1
        %v1827 = vadd.f32 %v1825, %v1826
        %v1828 = vmul.f32 %v1304, %v1304
        %v1829 = vmul.f32 %v1305, %v1305
        %v1830 = vmul.f32 %v1306, %v1306
        %v1831 = vmul.f32 %v1307, %v1307
        %v1832 = vsel %vm501, %v1828, 0.0
        %v1833 = vrot.slane %v1832, 4
        %v1834 = vadd.f32 %v1832, %v1833
        %v1835 = vrot.slane %v1834, 2
        %v1836 = vadd.f32 %v1834, %v1835
        %v1837 = vrot.slane %v1836, 1
        %v1838 = vadd.f32 %v1836, %v1837
        %v1839 = vsel %vm501, %v1829, 0.0
        %v1840 = vrot.slane %v1839, 4
        %v1841 = vadd.f32 %v1839, %v1840
        %v1842 = vrot.slane %v1841, 2
        %v1843 = vadd.f32 %v1841, %v1842
        %v1844 = vrot.slane %v1843, 1
        %v1845 = vadd.f32 %v1843, %v1844
        %v1846 = vsel %vm501, %v1830, 0.0
        %v1847 = vrot.slane %v1846, 4
        %v1848 = vadd.f32 %v1846, %v1847
        %v1849 = vrot.slane %v1848, 2
        %v1850 = vadd.f32 %v1848, %v1849
        %v1851 = vrot.slane %v1850, 1
        %v1852 = vadd.f32 %v1850, %v1851
        %v1853 = vsel %vm501, %v1831, 0.0
        %v1854 = vrot.slane %v1853, 4
        %v1855 = vadd.f32 %v1853, %v1854
        %v1856 = vrot.slane %v1855, 2
        %v1857 = vadd.f32 %v1855, %v1856
        %v1858 = vrot.slane %v1857, 1
        %v1859 = vadd.f32 %v1857, %v1858
        %v1860 = vmul.f32 %v1376, %v1376
        %v1861 = vmul.f32 %v1377, %v1377
        %v1862 = vmul.f32 %v1378, %v1378
        %v1863 = vmul.f32 %v1379, %v1379
        %v1864 = vsel %vm501, %v1860, 0.0
        %v1865 = vrot.slane %v1864, 4
        %v1866 = vadd.f32 %v1864, %v1865
        %v1867 = vrot.slane %v1866, 2
        %v1868 = vadd.f32 %v1866, %v1867
        %v1869 = vrot.slane %v1868, 1
        %v1870 = vadd.f32 %v1868, %v1869
        %v1871 = vsel %vm501, %v1861, 0.0
        %v1872 = vrot.slane %v1871, 4
        %v1873 = vadd.f32 %v1871, %v1872
        %v1874 = vrot.slane %v1873, 2
        %v1875 = vadd.f32 %v1873, %v1874
        %v1876 = vrot.slane %v1875, 1
        %v1877 = vadd.f32 %v1875, %v1876
        %v1878 = vsel %vm501, %v1862, 0.0
        %v1879 = vrot.slane %v1878, 4
        %v1880 = vadd.f32 %v1878, %v1879
        %v1881 = vrot.slane %v1880, 2
        %v1882 = vadd.f32 %v1880, %v1881
        %v1883 = vrot.slane %v1882, 1
        %v1884 = vadd.f32 %v1882, %v1883
        %v1885 = vsel %vm501, %v1863, 0.0
        %v1886 = vrot.slane %v1885, 4
        %v1887 = vadd.f32 %v1885, %v1886
        %v1888 = vrot.slane %v1887, 2
        %v1889 = vadd.f32 %v1887, %v1888
        %v1890 = vrot.slane %v1889, 1
        %v1891 = vadd.f32 %v1889, %v1890
        %v1892 = vsel %vm501, %v1304, inf
        %v1893 = vrot.slane %v1892, 4
        %v1894 = vmin.f32 %v1892, %v1893
        %v1895 = vrot.slane %v1894, 2
        %v1896 = vmin.f32 %v1894, %v1895
        %v1897 = vrot.slane %v1896, 1
        %v1898 = vmin.f32 %v1896, %v1897
        %v1899 = vsel %vm501, %v1305, inf
        %v1900 = vrot.slane %v1899, 4
        %v1901 = vmin.f32 %v1899, %v1900
        %v1902 = vrot.slane %v1901, 2
        %v1903 = vmin.f32 %v1901, %v1902
        %v1904 = vrot.slane %v1903, 1
        %v1905 = vmin.f32 %v1903, %v1904
        %v1906 = vsel %vm501, %v1306, inf
        %v1907 = vrot.slane %v1906, 4
        %v1908 = vmin.f32 %v1906, %v1907
        %v1909 = vrot.slane %v1908, 2
        %v1910 = vmin.f32 %v1908, %v1909
        %v1911 = vrot.slane %v1910, 1
        %v1912 = vmin.f32 %v1910, %v1911
        %v1913 = vsel %vm501, %v1307, inf
        %v1914 = vrot.slane %v1913, 4
        %v1915 = vmin.f32 %v1913, %v1914
        %v1916 = vrot.slane %v1915, 2
        %v1917 = vmin.f32 %v1915, %v1916
        %v1918 = vrot.slane %v1917, 1
        %v1919 = vmin.f32 %v1917, %v1918
        %v1920 = vsel %vm501, %v1376, inf
        %v1921 = vrot.slane %v1920, 4
        %v1922 = vmin.f32 %v1920, %v1921
        %v1923 = vrot.slane %v1922, 2
        %v1924 = vmin.f32 %v1922, %v1923
        %v1925 = vrot.slane %v1924, 1
        %v1926 = vmin.f32 %v1924, %v1925
        %v1927 = vsel %vm501, %v1377, inf
        %v1928 = vrot.slane %v1927, 4
        %v1929 = vmin.f32 %v1927, %v1928
        %v1930 = vrot.slane %v1929, 2
        %v1931 = vmin.f32 %v1929, %v1930
        %v1932 = vrot.slane %v1931, 1
        %v1933 = vmin.f32 %v1931, %v1932
        %v1934 = vsel %vm501, %v1378, inf
        %v1935 = vrot.slane %v1934, 4
        %v1936 = vmin.f32 %v1934, %v1935
        %v1937 = vrot.slane %v1936, 2
        %v1938 = vmin.f32 %v1936, %v1937
        %v1939 = vrot.slane %v1938, 1
        %v1940 = vmin.f32 %v1938, %v1939
        %v1941 = vsel %vm501, %v1379, inf
        %v1942 = vrot.slane %v1941, 4
        %v1943 = vmin.f32 %v1941, %v1942
        %v1944 = vrot.slane %v1943, 2
        %v1945 = vmin.f32 %v1943, %v1944
        %v1946 = vrot.slane %v1945, 1
        %v1947 = vmin.f32 %v1945, %v1946
        %v1952 = vsel %vm714, %v1753, %v1746
        %v1953 = vsel %vm716, %v1760, %v1952
        %v1954 = vsel %vm718, %v1767, %v1953
        %v1956 = vsel %vm721, %v1954, 0.0
        %1957 = vadd.xlane.f32.xlu0 %v1956
        %v1958 = vpop.xlane.xlu0 %1957
        %v1963 = vsel %vm714, %v1781, %v1774
        %v1964 = vsel %vm716, %v1788, %v1963
        %v1965 = vsel %vm718, %v1795, %v1964
        %v1967 = vsel %vm721, %v1965, 0.0
        %1968 = vadd.xlane.f32.xlu0 %v1967
        %v1969 = vpop.xlane.xlu0 %1968
        %v1974 = vsel %vm714, %v1813, %v1806
        %v1975 = vsel %vm716, %v1820, %v1974
        %v1976 = vsel %vm718, %v1827, %v1975
        %v1978 = vsel %vm721, %v1976, 0.0
        %1979 = vadd.xlane.f32.xlu0 %v1978
        %v1980 = vpop.xlane.xlu0 %1979
        %v1985 = vsel %vm714, %v1845, %v1838
        %v1986 = vsel %vm716, %v1852, %v1985
        %v1987 = vsel %vm718, %v1859, %v1986
        %v1989 = vsel %vm721, %v1987, 0.0
        %1990 = vadd.xlane.f32.xlu0 %v1989
        %v1991 = vpop.xlane.xlu0 %1990
        %v1996 = vsel %vm714, %v1877, %v1870
        %v1997 = vsel %vm716, %v1884, %v1996
        %v1998 = vsel %vm718, %v1891, %v1997
        %v2000 = vsel %vm721, %v1998, 0.0
        %2001 = vadd.xlane.f32.xlu0 %v2000
        %v2002 = vpop.xlane.xlu0 %2001
        %v2007 = vsel %vm714, %v1905, %v1898
        %v2008 = vsel %vm716, %v1912, %v2007
        %v2009 = vsel %vm718, %v1919, %v2008
        %v2011 = vsel %vm721, %v2009, inf
        %2012 = vmin.xlane.f32.xlu0 %v2011
        %v2013 = vpop.xlane.xlu0 %2012
        %v2018 = vsel %vm714, %v1933, %v1926
        %v2019 = vsel %vm716, %v1940, %v2018
        %v2020 = vsel %vm718, %v1947, %v2019
        %v2022 = vsel %vm721, %v2020, inf
        %2023 = vmin.xlane.f32.xlu0 %v2022
        %v2024 = vpop.xlane.xlu0 %2023
        %v2025 = vmul.f32 %v2024, %v1958
        %v2026 = vsub.f32 %v1980, %v2025
        %v2027 = vmul.f32 %v2013, %v1969
        %v2028 = vsub.f32 %v2026, %v2027
        %v2029 = vmul.f32 %v2013, 64.0
        %v2030 = vmul.f32 %v2029, %v2024
        %v2031 = vadd.f32 %v2028, %v2030
        %v2032 = vmul.f32 %v2013, 2.0
        %v2033 = vmul.f32 %v2032, %v1958
        %v2034 = vsub.f32 %v1991, %v2033
        %v2035 = vmul.f32 %v2029, %v2013
        %v2036 = vadd.f32 %v2034, %v2035
        %v2037 = vmul.f32 %v2024, 2.0
        %v2038 = vmul.f32 %v2037, %v1969
        %v2039 = vsub.f32 %v2002, %v2038
        %v2040 = vmul.f32 %v2024, 64.0
        %v2041 = vmul.f32 %v2040, %v2024
        %v2042 = vadd.f32 %v2039, %v2041
        %2043 = vrot.lane.b32.xlu0 %v1954, 120
        %v2044 = vpop.permute.xlu0 %2043
        %v2046 = vsel %vm721, %v2044, 0.0
        %2047 = vadd.xlane.f32.xlu0 %v2046
        %v2048 = vpop.xlane.xlu0 %2047
        %2049 = vrot.lane.b32.xlu0 %v1965, 120
        %v2050 = vpop.permute.xlu0 %2049
        %v2052 = vsel %vm721, %v2050, 0.0
        %2053 = vadd.xlane.f32.xlu0 %v2052
        %v2054 = vpop.xlane.xlu0 %2053
        %2055 = vrot.lane.b32.xlu0 %v1976, 120
        %v2056 = vpop.permute.xlu0 %2055
        %v2058 = vsel %vm721, %v2056, 0.0
        %2059 = vadd.xlane.f32.xlu0 %v2058
        %v2060 = vpop.xlane.xlu0 %2059
        %2061 = vrot.lane.b32.xlu0 %v1987, 120
        %v2062 = vpop.permute.xlu0 %2061
        %v2064 = vsel %vm721, %v2062, 0.0
        %2065 = vadd.xlane.f32.xlu0 %v2064
        %v2066 = vpop.xlane.xlu0 %2065
        %2067 = vrot.lane.b32.xlu0 %v1998, 120
        %v2068 = vpop.permute.xlu0 %2067
        %v2070 = vsel %vm721, %v2068, 0.0
        %2071 = vadd.xlane.f32.xlu0 %v2070
        %v2072 = vpop.xlane.xlu0 %2071
        %v2073 = vsel %vm839, %v2009, inf
        %2074 = vmin.xlane.f32.xlu0 %v2073
        %v2075 = vpop.xlane.xlu0 %2074
        %v2076 = vsel %vm839, %v2020, inf
        %2077 = vmin.xlane.f32.xlu0 %v2076
        %v2078 = vpop.xlane.xlu0 %2077
        %v2079 = vmul.f32 %v2078, %v2048
        %v2080 = vsub.f32 %v2060, %v2079
        %v2081 = vmul.f32 %v2075, %v2054
        %v2082 = vsub.f32 %v2080, %v2081
        %v2083 = vmul.f32 %v2075, 64.0
        %v2084 = vmul.f32 %v2083, %v2078
        %v2085 = vadd.f32 %v2082, %v2084
        %v2086 = vmul.f32 %v2075, 2.0
        %v2087 = vmul.f32 %v2086, %v2048
        %v2088 = vsub.f32 %v2066, %v2087
        %v2089 = vmul.f32 %v2083, %v2075
        %v2090 = vadd.f32 %v2088, %v2089
        %v2091 = vmul.f32 %v2078, 2.0
        %v2092 = vmul.f32 %v2091, %v2054
        %v2093 = vsub.f32 %v2072, %v2092
        %v2094 = vmul.f32 %v2078, 64.0
        %v2095 = vmul.f32 %v2094, %v2078
        %v2096 = vadd.f32 %v2093, %v2095
        %v2097 = vsel %vm864, %v2031, %v2085
        %v2098 = vsel %vm864, %v2036, %v2090
        %v2099 = vsel %vm864, %v2042, %v2096
        %vm2100 = vcmask 11264
        %2101 = vst.msk [vmem:[%s353] sm:$0xf] %vm2100, %v865
        %2102 = vst.msk [vmem:[%s353 + $0x4] sm:$0xf] %vm2100, %v1225
        %2103 = vst.msk [vmem:[%s353 + $0x8] sm:$0xf] %vm2100, %v866
        %2104 = vst.msk [vmem:[%s353 + $0xc] sm:$0xf] %vm2100, %v1226
        %2105 = vst.msk [vmem:[%s353 + $0x10] sm:$0xf] %vm2100, %v867
        %2106 = vst.msk [vmem:[%s353 + $0x14] sm:$0xf] %vm2100, %v1227
        %2107 = vst.msk [vmem:[%s353 + $0x18] sm:$0xf] %vm2100, %v1737
        %2108 = vst.msk [vmem:[%s353 + $0x1c] sm:$0xf] %vm2100, %v2097
        %2109 = vst.msk [vmem:[%s353 + $0x20] sm:$0xf] %vm2100, %v1738
        %2110 = vst.msk [vmem:[%s353 + $0x24] sm:$0xf] %vm2100, %v2098
        %2111 = vst.msk [vmem:[%s353 + $0x28] sm:$0xf] %vm2100, %v1739
        %2112 = vst.msk [vmem:[%s353 + $0x2c] sm:$0xf] %vm2100, %v2099
        %s2113 = smul.u32 2, %s26
        %p2114 = scmp.lt.s32.totalorder %s25, 1
        %s2115 = scalar_select %p2114, %s25, 1
        %p2116 = scmp.lt.s32.totalorder %s2113, 1
        %s2117 = scalar_select %p2116, %s2113, 1
        %s2118 = smul.addr %s2117, 6
        %s2119 = smul.addr %s2115, 12
        %s2120 = sadd.s32 %s2118, %s2119
        %s2121 = smul.addr %s2120, 4
        %s2122 = scalar_lea.vmem %s4, %s2121
        // Predicated region
        $region45: #{_lambda_.1} parent=35 // pred_check
          %p2123 = pneg %p165
        $region46: #{_lambda_.1} parent=35 // pred_check_branch
          %2125 = sbr.rel (%p2123) target = $region48
        $region47: #{_lambda_.1} parent=35 // pred_region
          %s2126 = smul.u32 2, %s26
        $region48: #{_lambda_.1} parent=35 // pred_fallthru
          _
      $region36: #{_lambda_.1} parent=5 // pred_fallthru
        _
      %p2127 = scmp.le.s32.totalorder 2, %s16
      // Predicated region
      $region49: #{_lambda_.1} parent=5 // pred_check
        %p2128 = pneg %p2127
      $region50: #{_lambda_.1} parent=5 // pred_check_branch
        %2130 = sbr.rel (%p2128) target = $region52
      $region51: #{_lambda_.1} parent=5 // pred_region
        %s2131 = ssub.s32 %s16, 2
        // Predicated region
        $region53: #{_lambda_.1} parent=51 // pred_check
          %p2132 = pneg %p171
        $region54: #{_lambda_.1} parent=51 // pred_check_branch
          %2134 = sbr.rel (%p2132) target = $region56
        $region55: #{_lambda_.1} parent=51 // pred_region
          %s2135 = smul.u32 2, %s28
          %p2136 = scmp.lt.s32.totalorder %s27, 1
          %s2137 = scalar_select %p2136, %s27, 1
          %p2138 = scmp.lt.s32.totalorder %s2135, 1
          %s2139 = scalar_select %p2138, %s2135, 1
          %s2140 = smul.addr %s2139, 6
          %s2141 = smul.addr %s2137, 12
          %s2142 = sadd.s32 %s2140, %s2141
          %s2143 = smul.addr %s2142, 4
          %s2144 = scalar_lea.vmem %s4, %s2143
        $region56: #{_lambda_.1} parent=51 // pred_fallthru
          _
      $region52: #{_lambda_.1} parent=5 // pred_fallthru
        _
    $region6: #{_lambda_.1} parent=1 // loop_footer
      %s20 = sadd.s32 1, %s16
    $region7: #{_lambda_.1} parent=1 // loop_footer_branch
      %15 = sbr.rel target = $region3
    $region8: #{_lambda_.1} parent=1 // loop_exit
      _
    %2145 = vsyncpa [#allocation3], 1
    %s2146 = scalar_lea.sflag [#allocation3], 1
    %2147 = vsyncpa %s2146, 1
    %2148 = vsyncpa [#allocation5], 1
    %s2149 = scalar_lea.sflag [#allocation5], 1
    %2150 = vsyncpa %s2149, 1

</llo_original>
